<compile_context>
chip_gen: v6e
topology: v6e:2x2x1
jax: 0.10.0
libtpu: 0.0.40
codegen_flags: <defaults>
</compile_context>

<pallas_src>
import jax
import jax.numpy as jnp
from jax.experimental import pallas as pl
from jax.experimental.pallas import tpu as pltpu


def _round_up(a, m):
    return ((a + m - 1) // m) * m


def make_cin_kernel(num_layers, split_half, F0, D, tile_b, layer_sizes):
    def kernel(x_ref, *refs):
        # refs = (w0, b0, w1, b1, ..., fc_w, fc_b, out_ref)
        out_ref = refs[-1]
        fc_b_ref = refs[-2]
        fc_w_ref = refs[-3]
        w_refs = refs[0:2 * num_layers:2]
        b_refs = refs[1:2 * num_layers:2]

        x0 = x_ref[0]                       # (F0, D*TILE_B); batch on lanes
        fc_w = fc_w_ref[...]                # (1, fc_dim)

        h = x0
        prev = F0
        off = 0
        acc = jnp.zeros((1, tile_b), dtype=jnp.float32)
        for i in range(num_layers):
            cout = layer_sizes[i]
            w = w_refs[i][...]              # (cout, prev*F0), columns ordered (p, f)
            b = b_refs[i][...]              # (cout, 1)
            # z[p*F0 + f, n] = h[p, n] * x0[f, n].  Leading-dims merge only; the
            # lane (minor) axis is untouched and each slab is 8-sublane aligned.
            z = (h[:, None, :] * x0[None, :, :]).reshape(prev * F0, D * tile_b)
            out = jnp.dot(w, z, preferred_element_type=jnp.float32) + b
            out = jnp.maximum(out, 0.0)     # relu
            if split_half and i != num_layers - 1:
                half = cout // 2
                x_part = out[:half]         # goes to the pooled output
                h = out[half:]              # fed to the next layer
                prev = half
            else:
                x_part = out
                h = out
                prev = cout
            rows = x_part.shape[0]
            # torch.sum(x, dim=2): D static lane-aligned TILE_B-wide slices (VPU adds).
            pooled = x_part[:, 0:tile_b]
            for d in range(1, D):
                pooled = pooled + x_part[:, d * tile_b:(d + 1) * tile_b]
            # fc contribution of this layer: (1, rows) @ (rows, TILE_B)
            acc = acc + jnp.dot(fc_w[:, off:off + rows], pooled,
                                preferred_element_type=jnp.float32)
            off += rows

        out_ref[...] = acc + fc_b_ref[...]  # lane-dense (1, TILE_B) store

    return kernel


def cin_forward(x, conv_ws, conv_bs, fc_w, fc_b, split_half=True, tile_b=None):
    """conv_ws[i]: (cout_i, F0*prev_i) in the PyTorch Conv1d (kernel_size=1) layout;
    conv_bs[i]: (cout_i, 1); fc_w: (1, fc_dim); fc_b: (1, 1)."""
    B, F0, D = x.shape
    num_layers = len(conv_ws)
    layer_sizes = [int(w.shape[0]) for w in conv_ws]
    if split_half:
        for cs in layer_sizes[:-1]:
            assert cs % 2 == 0, "split_half requires even intermediate layer sizes"

    # Batch tile: multiple of 128 (lane width).  Capped so the per-tile live set
    # (z dominates: prev*F0 * D*TILE_B * 4B) stays well inside VMEM on v7x too.
    if tile_b is None:
        tile_b = min(512, _round_up(B, 128))
    assert tile_b % 128 == 0
    Bp = _round_up(B, tile_b)
    num_tiles = Bp // tile_b
    n_cols = D * tile_b

    # One-time layout plumbing in the wrapper (plain XLA, outside the kernel):
    # (B, F0, D) -> pad batch -> (num_tiles, F0, D*TILE_B), columns ordered (d, b).
    if Bp != B:
        x = jnp.pad(x, ((0, Bp - B), (0, 0), (0, 0)))
    x_arr = (x.reshape(num_tiles, tile_b, F0, D)
              .transpose(0, 2, 3, 1)
              .reshape(num_tiles, F0, n_cols))

    # Permute conv weight columns from (f, p) to (p, f) ordering so the kernel's z
    # construction stays 8-sublane aligned.  Tiny, one-time, outside the kernel.
    conv_ws_perm = []
    prev = F0
    for i, w in enumerate(conv_ws):
        cout = layer_sizes[i]
        w_perm = (w.reshape(cout, F0, prev)
                   .transpose(0, 2, 1)
                   .reshape(cout, prev * F0))
        conv_ws_perm.append(w_perm)
        if split_half and i != num_layers - 1:
            prev = cout // 2
        else:
            prev = cout

    kernel = make_cin_kernel(num_layers, split_half, F0, D, tile_b, layer_sizes)

    params = []
    in_specs = [pl.BlockSpec((1, F0, n_cols), lambda i: (i, 0, 0))]
    for w, bias in zip(conv_ws_perm, conv_bs):
        params.append(w)
        params.append(bias)
        # Grid-invariant parameters: full-array blocks + constant index_map ->
        # stay resident in VMEM across all grid steps (no per-step re-DMA).
        in_specs.append(pl.BlockSpec(w.shape, lambda i: (0, 0)))
        in_specs.append(pl.BlockSpec(bias.shape, lambda i: (0, 0)))
    params.append(fc_w)
    params.append(fc_b)
    in_specs.append(pl.BlockSpec(fc_w.shape, lambda i: (0, 0)))
    in_specs.append(pl.BlockSpec(fc_b.shape, lambda i: (0, 0)))

    out_row = pl.pallas_call(
        kernel,
        out_shape=jax.ShapeDtypeStruct((1, Bp), jnp.float32),
        grid=(num_tiles,),
        in_specs=in_specs,
        out_specs=pl.BlockSpec((1, tile_b), lambda i: (0, i)),
        compiler_params=pltpu.CompilerParams(
            dimension_semantics=("parallel",)),
    )(x_arr, *params)

    return out_row[0, :B].reshape(B, 1)


def cin_reference(x, conv_ws, conv_bs, fc_w, fc_b, split_half=True):
    """Pure-JAX reference mirroring the PyTorch forward exactly."""
    B, F0, D = x.shape
    num_layers = len(conv_ws)
    x0 = x[:, :, None, :]                                # (B, F0, 1, D)
    h = x
    xs = []
    for i in range(num_layers):
        z = x0 * h[:, None, :, :]                        # (B, F0, H, D)
        z = z.reshape(B, -1, D)
        out = jnp.einsum('co,bod->bcd', conv_ws[i], z) + conv_bs[i][None]
        out = jnp.maximum(out, 0.0)
        if split_half and i != num_layers - 1:
            half = out.shape[1] // 2
            x_part, h = out[:, :half], out[:, half:]
        else:
            x_part, h = out, out
        xs.append(x_part)
    cat = jnp.concatenate(xs, axis=1)                    # (B, fc_dim, D)
    pooled = jnp.sum(cat, axis=2)                        # (B, fc_dim)
    return pooled @ fc_w.T + fc_b.reshape(1, 1)          # (B, 1)


if __name__ == "__main__":
    B, F0, D = 2, 8, 16                     # batch, num_fields (input_dim), embed_dim
    cross_layer_sizes = [8, 8]
    split_half = True

    key = jax.random.PRNGKey(0)
    n_keys = 1 + 2 * len(cross_layer_sizes) + 2
    keys = jax.random.split(key, n_keys)

    x = jax.random.normal(keys[0], (B, F0, D), dtype=jnp.float32)

    # Deterministic parameter init (Conv1d kernel_size=1 weights flattened to (Cout, Cin)).
    conv_ws, conv_bs = [], []
    prev, fc_dim, ki = F0, 0, 1
    for i, cs in enumerate(cross_layer_sizes):
        cin = F0 * prev
        conv_ws.append(0.1 * jax.random.normal(keys[ki], (cs, cin), dtype=jnp.float32))
        ki += 1
        conv_bs.append(0.1 * jax.random.normal(keys[ki], (cs, 1), dtype=jnp.float32))
        ki += 1
        if split_half and i != len(cross_layer_sizes) - 1:
            prev = cs // 2
        else:
            prev = cs
        fc_dim += prev
    fc_w = 0.1 * jax.random.normal(keys[ki], (1, fc_dim), dtype=jnp.float32)
    ki += 1
    fc_b = 0.1 * jax.random.normal(keys[ki], (1, 1), dtype=jnp.float32)

    out = cin_forward(x, conv_ws, conv_bs, fc_w, fc_b, split_half=split_half)
    out = jax.block_until_ready(out)

    ref = cin_reference(x, conv_ws, conv_bs, fc_w, fc_b, split_half=split_half)
    assert out.shape == (B, 1), out.shape
    # f32 MXU default precision in both kernel and reference; reductions reordered
    # (embed-sum as lane-block accumulation), hence the slightly relaxed tolerance.
    assert jnp.allclose(out, ref, atol=1e-3, rtol=1e-3), (out, ref)

    print("KERNEL_OK")
</pallas_src>

<mosaic_0001>
module attributes {stable_mosaic.version = 11 : i64} {
  func.func @kernel(%arg0: i32, %arg1: memref<1x8x2048xf32, #tpu.memory_space<vmem>>, %arg2: memref<8x64xf32, #tpu.memory_space<vmem>>, %arg3: memref<8x1xf32, #tpu.memory_space<vmem>>, %arg4: memref<8x32xf32, #tpu.memory_space<vmem>>, %arg5: memref<8x1xf32, #tpu.memory_space<vmem>>, %arg6: memref<1x12xf32, #tpu.memory_space<vmem>>, %arg7: memref<1x1xf32, #tpu.memory_space<vmem>>, %arg8: memref<1x128xf32, #tpu.memory_space<vmem>>) attributes {dimension_semantics = [#tpu.dimension_semantics<parallel>], iteration_bounds = array<i64: 1>, scalar_prefetch = 0 : i64, scratch_operands = 0 : i64, tpu.core_type = #tpu.core_type<tc>, window_params = [{transform_indices = @transform_0, window_bounds = array<i64: 1, 8, 2048>}, {pipeline_mode = #tpu.pipeline_mode<synchronous>, transform_indices = @transform_1, window_bounds = array<i64: 8, 64>}, {pipeline_mode = #tpu.pipeline_mode<synchronous>, transform_indices = @transform_2, window_bounds = array<i64: 8, 1>}, {pipeline_mode = #tpu.pipeline_mode<synchronous>, transform_indices = @transform_3, window_bounds = array<i64: 8, 32>}, {pipeline_mode = #tpu.pipeline_mode<synchronous>, transform_indices = @transform_4, window_bounds = array<i64: 8, 1>}, {pipeline_mode = #tpu.pipeline_mode<synchronous>, transform_indices = @transform_5, window_bounds = array<i64: 1, 12>}, {pipeline_mode = #tpu.pipeline_mode<synchronous>, transform_indices = @transform_6, window_bounds = array<i64: 1, 1>}, {transform_indices = @transform_7, window_bounds = array<i64: 1, 128>}]} {
    %c0 = arith.constant 0 : index
    %c0_0 = arith.constant 0 : index
    %c0_1 = arith.constant 0 : index
    %0 = vector.load %arg1[%c0, %c0_0, %c0_1] : memref<1x8x2048xf32, #tpu.memory_space<vmem>>, vector<1x8x2048xf32>
    %1 = vector.shape_cast %0 : vector<1x8x2048xf32> to vector<8x2048xf32>
    %c0_2 = arith.constant 0 : index
    %c0_3 = arith.constant 0 : index
    %2 = vector.load %arg6[%c0_2, %c0_3] : memref<1x12xf32, #tpu.memory_space<vmem>>, vector<1x12xf32>
    %cst = arith.constant 0.000000e+00 : f32
    %3 = vector.broadcast %cst : f32 to vector<1x128xf32>
    %c0_4 = arith.constant 0 : index
    %c0_5 = arith.constant 0 : index
    %4 = vector.load %arg2[%c0_4, %c0_5] : memref<8x64xf32, #tpu.memory_space<vmem>>, vector<8x64xf32>
    %c0_6 = arith.constant 0 : index
    %c0_7 = arith.constant 0 : index
    %5 = vector.load %arg3[%c0_6, %c0_7] : memref<8x1xf32, #tpu.memory_space<vmem>>, vector<8x1xf32>
    %6 = vector.shape_cast %1 : vector<8x2048xf32> to vector<8x1x2048xf32>
    %7 = vector.shape_cast %1 : vector<8x2048xf32> to vector<1x8x2048xf32>
    %8 = vector.broadcast %6 : vector<8x1x2048xf32> to vector<8x8x2048xf32>
    %9 = vector.broadcast %7 : vector<1x8x2048xf32> to vector<8x8x2048xf32>
    %10 = arith.mulf %8, %9 : vector<8x8x2048xf32>
    %11 = vector.shape_cast %10 : vector<8x8x2048xf32> to vector<64x2048xf32>
    %cst_8 = arith.constant dense<0.000000e+00> : vector<8x2048xf32>
    %12 = tpu.matmul %4, %11, %cst_8 {dimension_numbers = #tpu.dot_dimension_numbers<[1], [0], [0], [1], [0, 0, 1, 1], [], []>} : vector<8x64xf32>, vector<64x2048xf32>, vector<8x2048xf32> -> vector<8x2048xf32>
    %13 = vector.broadcast %5 : vector<8x1xf32> to vector<8x2048xf32>
    %14 = arith.addf %12, %13 : vector<8x2048xf32>
    %cst_9 = arith.constant 0.000000e+00 : f32
    %15 = vector.broadcast %cst_9 : f32 to vector<8x2048xf32>
    %16 = arith.maximumf %14, %15 : vector<8x2048xf32>
    %17 = vector.extract_strided_slice %16 {offsets = [0, 0], sizes = [4, 2048], strides = [1, 1]} : vector<8x2048xf32> to vector<4x2048xf32>
    %18 = vector.extract_strided_slice %16 {offsets = [4, 0], sizes = [4, 2048], strides = [1, 1]} : vector<8x2048xf32> to vector<4x2048xf32>
    %19 = vector.extract_strided_slice %17 {offsets = [0, 0], sizes = [4, 128], strides = [1, 1]} : vector<4x2048xf32> to vector<4x128xf32>
    %20 = vector.extract_strided_slice %17 {offsets = [0, 128], sizes = [4, 128], strides = [1, 1]} : vector<4x2048xf32> to vector<4x128xf32>
    %21 = arith.addf %19, %20 : vector<4x128xf32>
    %22 = vector.extract_strided_slice %17 {offsets = [0, 256], sizes = [4, 128], strides = [1, 1]} : vector<4x2048xf32> to vector<4x128xf32>
    %23 = arith.addf %21, %22 : vector<4x128xf32>
    %24 = vector.extract_strided_slice %17 {offsets = [0, 384], sizes = [4, 128], strides = [1, 1]} : vector<4x2048xf32> to vector<4x128xf32>
    %25 = arith.addf %23, %24 : vector<4x128xf32>
    %26 = vector.extract_strided_slice %17 {offsets = [0, 512], sizes = [4, 128], strides = [1, 1]} : vector<4x2048xf32> to vector<4x128xf32>
    %27 = arith.addf %25, %26 : vector<4x128xf32>
    %28 = vector.extract_strided_slice %17 {offsets = [0, 640], sizes = [4, 128], strides = [1, 1]} : vector<4x2048xf32> to vector<4x128xf32>
    %29 = arith.addf %27, %28 : vector<4x128xf32>
    %30 = vector.extract_strided_slice %17 {offsets = [0, 768], sizes = [4, 128], strides = [1, 1]} : vector<4x2048xf32> to vector<4x128xf32>
    %31 = arith.addf %29, %30 : vector<4x128xf32>
    %32 = vector.extract_strided_slice %17 {offsets = [0, 896], sizes = [4, 128], strides = [1, 1]} : vector<4x2048xf32> to vector<4x128xf32>
    %33 = arith.addf %31, %32 : vector<4x128xf32>
    %34 = vector.extract_strided_slice %17 {offsets = [0, 1024], sizes = [4, 128], strides = [1, 1]} : vector<4x2048xf32> to vector<4x128xf32>
    %35 = arith.addf %33, %34 : vector<4x128xf32>
    %36 = vector.extract_strided_slice %17 {offsets = [0, 1152], sizes = [4, 128], strides = [1, 1]} : vector<4x2048xf32> to vector<4x128xf32>
    %37 = arith.addf %35, %36 : vector<4x128xf32>
    %38 = vector.extract_strided_slice %17 {offsets = [0, 1280], sizes = [4, 128], strides = [1, 1]} : vector<4x2048xf32> to vector<4x128xf32>
    %39 = arith.addf %37, %38 : vector<4x128xf32>
    %40 = vector.extract_strided_slice %17 {offsets = [0, 1408], sizes = [4, 128], strides = [1, 1]} : vector<4x2048xf32> to vector<4x128xf32>
    %41 = arith.addf %39, %40 : vector<4x128xf32>
    %42 = vector.extract_strided_slice %17 {offsets = [0, 1536], sizes = [4, 128], strides = [1, 1]} : vector<4x2048xf32> to vector<4x128xf32>
    %43 = arith.addf %41, %42 : vector<4x128xf32>
    %44 = vector.extract_strided_slice %17 {offsets = [0, 1664], sizes = [4, 128], strides = [1, 1]} : vector<4x2048xf32> to vector<4x128xf32>
    %45 = arith.addf %43, %44 : vector<4x128xf32>
    %46 = vector.extract_strided_slice %17 {offsets = [0, 1792], sizes = [4, 128], strides = [1, 1]} : vector<4x2048xf32> to vector<4x128xf32>
    %47 = arith.addf %45, %46 : vector<4x128xf32>
    %48 = vector.extract_strided_slice %17 {offsets = [0, 1920], sizes = [4, 128], strides = [1, 1]} : vector<4x2048xf32> to vector<4x128xf32>
    %49 = arith.addf %47, %48 : vector<4x128xf32>
    %50 = vector.extract_strided_slice %2 {offsets = [0, 0], sizes = [1, 4], strides = [1, 1]} : vector<1x12xf32> to vector<1x4xf32>
    %cst_10 = arith.constant dense<0.000000e+00> : vector<1x128xf32>
    %51 = tpu.matmul %50, %49, %cst_10 {dimension_numbers = #tpu.dot_dimension_numbers<[1], [0], [0], [1], [0, 0, 1, 1], [], []>} : vector<1x4xf32>, vector<4x128xf32>, vector<1x128xf32> -> vector<1x128xf32>
    %52 = arith.addf %3, %51 : vector<1x128xf32>
    %c0_11 = arith.constant 0 : index
    %c0_12 = arith.constant 0 : index
    %53 = vector.load %arg4[%c0_11, %c0_12] : memref<8x32xf32, #tpu.memory_space<vmem>>, vector<8x32xf32>
    %c0_13 = arith.constant 0 : index
    %c0_14 = arith.constant 0 : index
    %54 = vector.load %arg5[%c0_13, %c0_14] : memref<8x1xf32, #tpu.memory_space<vmem>>, vector<8x1xf32>
    %55 = vector.shape_cast %18 : vector<4x2048xf32> to vector<4x1x2048xf32>
    %56 = vector.shape_cast %1 : vector<8x2048xf32> to vector<1x8x2048xf32>
    %57 = vector.broadcast %55 : vector<4x1x2048xf32> to vector<4x8x2048xf32>
    %58 = vector.broadcast %56 : vector<1x8x2048xf32> to vector<4x8x2048xf32>
    %59 = arith.mulf %57, %58 : vector<4x8x2048xf32>
    %60 = vector.shape_cast %59 : vector<4x8x2048xf32> to vector<32x2048xf32>
    %cst_15 = arith.constant dense<0.000000e+00> : vector<8x2048xf32>
    %61 = tpu.matmul %53, %60, %cst_15 {dimension_numbers = #tpu.dot_dimension_numbers<[1], [0], [0], [1], [0, 0, 1, 1], [], []>} : vector<8x32xf32>, vector<32x2048xf32>, vector<8x2048xf32> -> vector<8x2048xf32>
    %62 = vector.broadcast %54 : vector<8x1xf32> to vector<8x2048xf32>
    %63 = arith.addf %61, %62 : vector<8x2048xf32>
    %cst_16 = arith.constant 0.000000e+00 : f32
    %64 = vector.broadcast %cst_16 : f32 to vector<8x2048xf32>
    %65 = arith.maximumf %63, %64 : vector<8x2048xf32>
    %66 = vector.extract_strided_slice %65 {offsets = [0, 0], sizes = [8, 128], strides = [1, 1]} : vector<8x2048xf32> to vector<8x128xf32>
    %67 = vector.extract_strided_slice %65 {offsets = [0, 128], sizes = [8, 128], strides = [1, 1]} : vector<8x2048xf32> to vector<8x128xf32>
    %68 = arith.addf %66, %67 : vector<8x128xf32>
    %69 = vector.extract_strided_slice %65 {offsets = [0, 256], sizes = [8, 128], strides = [1, 1]} : vector<8x2048xf32> to vector<8x128xf32>
    %70 = arith.addf %68, %69 : vector<8x128xf32>
    %71 = vector.extract_strided_slice %65 {offsets = [0, 384], sizes = [8, 128], strides = [1, 1]} : vector<8x2048xf32> to vector<8x128xf32>
    %72 = arith.addf %70, %71 : vector<8x128xf32>
    %73 = vector.extract_strided_slice %65 {offsets = [0, 512], sizes = [8, 128], strides = [1, 1]} : vector<8x2048xf32> to vector<8x128xf32>
    %74 = arith.addf %72, %73 : vector<8x128xf32>
    %75 = vector.extract_strided_slice %65 {offsets = [0, 640], sizes = [8, 128], strides = [1, 1]} : vector<8x2048xf32> to vector<8x128xf32>
    %76 = arith.addf %74, %75 : vector<8x128xf32>
    %77 = vector.extract_strided_slice %65 {offsets = [0, 768], sizes = [8, 128], strides = [1, 1]} : vector<8x2048xf32> to vector<8x128xf32>
    %78 = arith.addf %76, %77 : vector<8x128xf32>
    %79 = vector.extract_strided_slice %65 {offsets = [0, 896], sizes = [8, 128], strides = [1, 1]} : vector<8x2048xf32> to vector<8x128xf32>
    %80 = arith.addf %78, %79 : vector<8x128xf32>
    %81 = vector.extract_strided_slice %65 {offsets = [0, 1024], sizes = [8, 128], strides = [1, 1]} : vector<8x2048xf32> to vector<8x128xf32>
    %82 = arith.addf %80, %81 : vector<8x128xf32>
    %83 = vector.extract_strided_slice %65 {offsets = [0, 1152], sizes = [8, 128], strides = [1, 1]} : vector<8x2048xf32> to vector<8x128xf32>
    %84 = arith.addf %82, %83 : vector<8x128xf32>
    %85 = vector.extract_strided_slice %65 {offsets = [0, 1280], sizes = [8, 128], strides = [1, 1]} : vector<8x2048xf32> to vector<8x128xf32>
    %86 = arith.addf %84, %85 : vector<8x128xf32>
    %87 = vector.extract_strided_slice %65 {offsets = [0, 1408], sizes = [8, 128], strides = [1, 1]} : vector<8x2048xf32> to vector<8x128xf32>
    %88 = arith.addf %86, %87 : vector<8x128xf32>
    %89 = vector.extract_strided_slice %65 {offsets = [0, 1536], sizes = [8, 128], strides = [1, 1]} : vector<8x2048xf32> to vector<8x128xf32>
    %90 = arith.addf %88, %89 : vector<8x128xf32>
    %91 = vector.extract_strided_slice %65 {offsets = [0, 1664], sizes = [8, 128], strides = [1, 1]} : vector<8x2048xf32> to vector<8x128xf32>
    %92 = arith.addf %90, %91 : vector<8x128xf32>
    %93 = vector.extract_strided_slice %65 {offsets = [0, 1792], sizes = [8, 128], strides = [1, 1]} : vector<8x2048xf32> to vector<8x128xf32>
    %94 = arith.addf %92, %93 : vector<8x128xf32>
    %95 = vector.extract_strided_slice %65 {offsets = [0, 1920], sizes = [8, 128], strides = [1, 1]} : vector<8x2048xf32> to vector<8x128xf32>
    %96 = arith.addf %94, %95 : vector<8x128xf32>
    %97 = vector.extract_strided_slice %2 {offsets = [0, 4], sizes = [1, 8], strides = [1, 1]} : vector<1x12xf32> to vector<1x8xf32>
    %cst_17 = arith.constant dense<0.000000e+00> : vector<1x128xf32>
    %98 = tpu.matmul %97, %96, %cst_17 {dimension_numbers = #tpu.dot_dimension_numbers<[1], [0], [0], [1], [0, 0, 1, 1], [], []>} : vector<1x8xf32>, vector<8x128xf32>, vector<1x128xf32> -> vector<1x128xf32>
    %99 = arith.addf %52, %98 : vector<1x128xf32>
    %c0_18 = arith.constant 0 : index
    %c0_19 = arith.constant 0 : index
    %100 = vector.load %arg7[%c0_18, %c0_19] : memref<1x1xf32, #tpu.memory_space<vmem>>, vector<1x1xf32>
    %101 = vector.broadcast %100 : vector<1x1xf32> to vector<1x128xf32>
    %102 = arith.addf %99, %101 : vector<1x128xf32>
    %c0_20 = arith.constant 0 : index
    %c0_21 = arith.constant 0 : index
    %103 = vector.load %arg8[%c0_20, %c0_21] : memref<1x128xf32, #tpu.memory_space<vmem>>, vector<1x128xf32>
    tpu.vector_store %arg8[%c0_20, %c0_21], %102 {strides = array<i32>} : memref<1x128xf32, #tpu.memory_space<vmem>>, vector<1x128xf32>,
    return
  }
  func.func @transform_0(%arg0: i32) -> (i32, i32, i32) {
    %c0_i32 = arith.constant 0 : i32
    %c0_i32_0 = arith.constant 0 : i32
    %c0_i32_1 = arith.constant 0 : i32
    return %arg0, %c0_i32, %c0_i32_0 : i32, i32, i32
  }
  func.func @transform_1(%arg0: i32) -> (i32, i32) {
    %c0_i32 = arith.constant 0 : i32
    %c0_i32_0 = arith.constant 0 : i32
    %c0_i32_1 = arith.constant 0 : i32
    return %c0_i32, %c0_i32_0 : i32, i32
  }
  func.func @transform_2(%arg0: i32) -> (i32, i32) {
    %c0_i32 = arith.constant 0 : i32
    %c0_i32_0 = arith.constant 0 : i32
    %c0_i32_1 = arith.constant 0 : i32
    return %c0_i32, %c0_i32_0 : i32, i32
  }
  func.func @transform_3(%arg0: i32) -> (i32, i32) {
    %c0_i32 = arith.constant 0 : i32
    %c0_i32_0 = arith.constant 0 : i32
    %c0_i32_1 = arith.constant 0 : i32
    return %c0_i32, %c0_i32_0 : i32, i32
  }
  func.func @transform_4(%arg0: i32) -> (i32, i32) {
    %c0_i32 = arith.constant 0 : i32
    %c0_i32_0 = arith.constant 0 : i32
    %c0_i32_1 = arith.constant 0 : i32
    return %c0_i32, %c0_i32_0 : i32, i32
  }
  func.func @transform_5(%arg0: i32) -> (i32, i32) {
    %c0_i32 = arith.constant 0 : i32
    %c0_i32_0 = arith.constant 0 : i32
    %c0_i32_1 = arith.constant 0 : i32
    return %c0_i32, %c0_i32_0 : i32, i32
  }
  func.func @transform_6(%arg0: i32) -> (i32, i32) {
    %c0_i32 = arith.constant 0 : i32
    %c0_i32_0 = arith.constant 0 : i32
    %c0_i32_1 = arith.constant 0 : i32
    return %c0_i32, %c0_i32_0 : i32, i32
  }
  func.func @transform_7(%arg0: i32) -> (i32, i32) {
    %c0_i32 = arith.constant 0 : i32
    %c0_i32_0 = arith.constant 0 : i32
    return %c0_i32, %arg0 : i32, i32
  }
}

</mosaic_0001>

<llo_original>
// kernel: tpu_custom_call.1
$region0: #{tpu_custom_call.1}
  #allocation0 [shape = 'u32[]', space=smem, size = 0x4, offset = 0x4, fixed_abs, tag = 'smem constant byte address 0x4 - core index']
  #allocation1 [shape = 'u32[144,128]{1,0:T(1,128)}', space=vmem, size = 0x12000, scoped, tag = 'internal scratch']
  #allocation2 [shape = 'f32[1,1]{1,0:T(1,128)S(1)}', space=vmem, size = 0x200, scoped, tag = 'scoped memory for tpu_custom_call.1']
  %s0 = inlined_call_operand.hbm [shape: f32[1,8,2048], index: 0, kind: input, shape index: {}]
  %s1 = inlined_call_operand.vmem [shape: f32[8,64], index: 1, kind: input, shape index: {}]
  %s2 = inlined_call_operand.vmem [shape: f32[8,1], index: 2, kind: input, shape index: {}]
  %s3 = inlined_call_operand.vmem [shape: f32[8,32], index: 3, kind: input, shape index: {}]
  %s4 = inlined_call_operand.vmem [shape: f32[8,1], index: 4, kind: input, shape index: {}]
  %s5 = inlined_call_operand.vmem [shape: f32[1,12], index: 5, kind: input, shape index: {}]
  %s6 = inlined_call_operand.<no memory space> [shape: f32[1,1], index: 6, kind: input, shape index: {}]
  %s7 = inlined_call_operand.hbm [shape: f32[1,128], index: 7, kind: output, shape index: {}]
  %s8 = sld [smem:[#allocation0]]
  $region42: #{tpu_custom_call.1} parent=0
    _
  %s10 = ssub.s32 1, %s8
  %s11 = scalar_select 0, %s10, %s8
  %v12 = vstv %s6
  %13 = vst [vmem:[#allocation2] sm:$0x1] %v12
  $region1: #{tpu_custom_call.1} parent=0
    #allocation3 [shape = 'u8[65536]{0}', space=vmem, size = 0x10000, scoped, tag = 'input window, operand 0, single buffered']
    #allocation4 [shape = 's32[1]{0}', space=sflag, size = 0x4, scoped, tag = 'scoped memory for tpu_custom_call.1']
    #allocation5 [shape = 's32[1]{0}', space=sflag, size = 0x4, scoped, tag = 'scoped memory for tpu_custom_call.1']
    #allocation6 [shape = 'u8[512]{0}', space=vmem, size = 0x400, scoped, tag = 'output window, operand 0, single buffered']
    %14 = vsyncpa [#allocation4], 0
    %15 = vsyncpa [#allocation5], 0
    // Predicated region
    $region2: #{tpu_custom_call.1} parent=1 // pred_check
      _
    $region3: #{tpu_custom_call.1} parent=1 // pred_check_branch
      %17 = sbr.rel (0) target = $region5
    $region4: #{tpu_custom_call.1} parent=1 // pred_region
      %s19 = ssub.s32 2048, 2048
      %20 = vsyncadd [#allocation4], %s19
      %s22 = sshll.u32 [#allocation3], 4
      %s23 = int_to_ptr.vmem [resolvable:$true] %s22
      %25 = dma.hbm_to_vmem [thread:$0]  %s0, 2048, %s23, [#allocation4]
    $region5: #{tpu_custom_call.1} parent=1 // pred_fallthru
      _
    // Predicated region
    $region6: #{tpu_custom_call.1} parent=1 // pred_check
      _
    $region7: #{tpu_custom_call.1} parent=1 // pred_check_branch
      %27 = sbr.rel (0) target = $region9
    $region8: #{tpu_custom_call.1} parent=1 // pred_region
      _
    $region9: #{tpu_custom_call.1} parent=1 // pred_fallthru
      _
    // Predicated region
    $region10: #{tpu_custom_call.1} parent=1 // pred_check
      _
    $region11: #{tpu_custom_call.1} parent=1 // pred_check_branch
      %29 = sbr.rel (0) target = $region13
    $region12: #{tpu_custom_call.1} parent=1 // pred_region
      _
    $region13: #{tpu_custom_call.1} parent=1 // pred_fallthru
      _
    // Predicated region
    $region14: #{tpu_custom_call.1} parent=1 // pred_check
      _
    $region15: #{tpu_custom_call.1} parent=1 // pred_check_branch
      %31 = sbr.rel (0) target = $region17
    $region16: #{tpu_custom_call.1} parent=1 // pred_region
      _
    $region17: #{tpu_custom_call.1} parent=1 // pred_fallthru
      _
    // Predicated region
    $region18: #{tpu_custom_call.1} parent=1 // pred_check
      _
    $region19: #{tpu_custom_call.1} parent=1 // pred_check_branch
      %33 = sbr.rel (0) target = $region21
    $region20: #{tpu_custom_call.1} parent=1 // pred_region
      _
    $region21: #{tpu_custom_call.1} parent=1 // pred_fallthru
      _
    // Predicated region
    $region22: #{tpu_custom_call.1} parent=1 // pred_check
      _
    $region23: #{tpu_custom_call.1} parent=1 // pred_check_branch
      %35 = sbr.rel (0) target = $region25
    $region24: #{tpu_custom_call.1} parent=1 // pred_region
      _
    $region25: #{tpu_custom_call.1} parent=1 // pred_fallthru
      _
    // Predicated region
    $region26: #{tpu_custom_call.1} parent=1 // pred_check
      _
    $region27: #{tpu_custom_call.1} parent=1 // pred_check_branch
      %37 = sbr.rel (0) target = $region29
    $region28: #{tpu_custom_call.1} parent=1 // pred_region
      _
    $region29: #{tpu_custom_call.1} parent=1 // pred_fallthru
      _
    // Predicated region
    $region30: #{tpu_custom_call.1} parent=1 // pred_check
      _
    $region31: #{tpu_custom_call.1} parent=1 // pred_check_branch
      %39 = sbr.rel (0) target = $region33
    $region32: #{tpu_custom_call.1} parent=1 // pred_region
      %40 = dma.done [#allocation4], 2048
    $region33: #{tpu_custom_call.1} parent=1 // pred_fallthru
      _
    %v41 = vld [vmem:[#allocation3] sm:$0xff]
    %v42 = vld [vmem:[#allocation3 + $0x8] sm:$0xff]
    %v43 = vld [vmem:[#allocation3 + $0x10] sm:$0xff]
    %v44 = vld [vmem:[#allocation3 + $0x18] sm:$0xff]
    %v45 = vld [vmem:[#allocation3 + $0x20] sm:$0xff]
    %v46 = vld [vmem:[#allocation3 + $0x28] sm:$0xff]
    %v47 = vld [vmem:[#allocation3 + $0x30] sm:$0xff]
    %v48 = vld [vmem:[#allocation3 + $0x38] sm:$0xff]
    %v49 = vld [vmem:[#allocation3 + $0x40] sm:$0xff]
    %v50 = vld [vmem:[#allocation3 + $0x48] sm:$0xff]
    %v51 = vld [vmem:[#allocation3 + $0x50] sm:$0xff]
    %v52 = vld [vmem:[#allocation3 + $0x58] sm:$0xff]
    %v53 = vld [vmem:[#allocation3 + $0x60] sm:$0xff]
    %v54 = vld [vmem:[#allocation3 + $0x68] sm:$0xff]
    %v55 = vld [vmem:[#allocation3 + $0x70] sm:$0xff]
    %v56 = vld [vmem:[#allocation3 + $0x78] sm:$0xff]
    %v57 = vld [vmem:[%s5] sm:$0x1]
    %v58 = vld [vmem:[%s1] sm:$0xff]
    %v59 = vld [vmem:[%s2] sm:$0xff]
    %v76 = vcombine.low %v41, %v42
    %v77 = vcombine.high %v41, %v42
    %v78 = vcombine.low %v43, %v44
    %v79 = vcombine.high %v43, %v44
    %v80 = vcombine.low %v45, %v46
    %v81 = vcombine.high %v45, %v46
    %v82 = vcombine.low %v47, %v48
    %v83 = vcombine.high %v47, %v48
    %v85 = vunpack.c.l.s4 1966171168
    %v86 = vunpack.c.0.s8 %v85
    %v87 = vlaneseq
    %v88 = vshrl.u32 %v87, 7
    %v89 = vsub.s32 %v86, %v88
    %v90 = vrot.slane %v76, %v89
    %v92 = vunpack.c.l.s4 1966171168
    %v93 = vunpack.c.0.s8 %v92
    %v94 = vlaneseq
    %v95 = vshrl.u32 %v94, 7
    %v96 = vsub.s32 %v93, %v95
    %v97 = vrot.slane %v77, %v96
    %v99 = vunpack.c.l.s4 1966171168
    %v100 = vunpack.c.0.s8 %v99
    %v101 = vlaneseq
    %v102 = vshrl.u32 %v101, 7
    %v103 = vsub.s32 %v100, %v102
    %v104 = vrot.slane %v78, %v103
    %v106 = vunpack.c.l.s4 1966171168
    %v107 = vunpack.c.0.s8 %v106
    %v108 = vlaneseq
    %v109 = vshrl.u32 %v108, 7
    %v110 = vsub.s32 %v107, %v109
    %v111 = vrot.slane %v79, %v110
    %v113 = vunpack.c.l.s4 1966171168
    %v114 = vunpack.c.0.s8 %v113
    %v115 = vlaneseq
    %v116 = vshrl.u32 %v115, 7
    %v117 = vsub.s32 %v114, %v116
    %v118 = vrot.slane %v80, %v117
    %v120 = vunpack.c.l.s4 1966171168
    %v121 = vunpack.c.0.s8 %v120
    %v122 = vlaneseq
    %v123 = vshrl.u32 %v122, 7
    %v124 = vsub.s32 %v121, %v123
    %v125 = vrot.slane %v81, %v124
    %v127 = vunpack.c.l.s4 1966171168
    %v128 = vunpack.c.0.s8 %v127
    %v129 = vlaneseq
    %v130 = vshrl.u32 %v129, 7
    %v131 = vsub.s32 %v128, %v130
    %v132 = vrot.slane %v82, %v131
    %v134 = vunpack.c.l.s4 1966171168
    %v135 = vunpack.c.0.s8 %v134
    %v136 = vlaneseq
    %v137 = vshrl.u32 %v136, 7
    %v138 = vsub.s32 %v135, %v137
    %v139 = vrot.slane %v83, %v138
    %v140 = vcombine.low %v90, %v104
    %v141 = vcombine.high %v90, %v104
    %v142 = vcombine.low %v97, %v111
    %v143 = vcombine.high %v97, %v111
    %v144 = vcombine.low %v118, %v132
    %v145 = vcombine.high %v118, %v132
    %v146 = vcombine.low %v125, %v139
    %v147 = vcombine.high %v125, %v139
    %v149 = vunpack.c.l.s4 1966171168
    %v150 = vunpack.c.0.s8 %v149
    %v151 = vlaneseq
    %v152 = vshrl.u32 %v151, 7
    %v153 = vsub.s32 %v150, %v152
    %v154 = vrot.slane %v140, %v153
    %v156 = vunpack.c.l.s4 1966171168
    %v157 = vunpack.c.0.s8 %v156
    %v158 = vlaneseq
    %v159 = vshrl.u32 %v158, 7
    %v160 = vsub.s32 %v157, %v159
    %v161 = vrot.slane %v142, %v160
    %v163 = vunpack.c.l.s4 1966171168
    %v164 = vunpack.c.0.s8 %v163
    %v165 = vlaneseq
    %v166 = vshrl.u32 %v165, 7
    %v167 = vsub.s32 %v164, %v166
    %v168 = vrot.slane %v141, %v167
    %v170 = vunpack.c.l.s4 1966171168
    %v171 = vunpack.c.0.s8 %v170
    %v172 = vlaneseq
    %v173 = vshrl.u32 %v172, 7
    %v174 = vsub.s32 %v171, %v173
    %v175 = vrot.slane %v143, %v174
    %v177 = vunpack.c.l.s4 1966171168
    %v178 = vunpack.c.0.s8 %v177
    %v179 = vlaneseq
    %v180 = vshrl.u32 %v179, 7
    %v181 = vsub.s32 %v178, %v180
    %v182 = vrot.slane %v144, %v181
    %v184 = vunpack.c.l.s4 1966171168
    %v185 = vunpack.c.0.s8 %v184
    %v186 = vlaneseq
    %v187 = vshrl.u32 %v186, 7
    %v188 = vsub.s32 %v185, %v187
    %v189 = vrot.slane %v146, %v188
    %v191 = vunpack.c.l.s4 1966171168
    %v192 = vunpack.c.0.s8 %v191
    %v193 = vlaneseq
    %v194 = vshrl.u32 %v193, 7
    %v195 = vsub.s32 %v192, %v194
    %v196 = vrot.slane %v145, %v195
    %v198 = vunpack.c.l.s4 1966171168
    %v199 = vunpack.c.0.s8 %v198
    %v200 = vlaneseq
    %v201 = vshrl.u32 %v200, 7
    %v202 = vsub.s32 %v199, %v201
    %v203 = vrot.slane %v147, %v202
    %v204 = vcombine.low %v154, %v182
    %v205 = vcombine.high %v154, %v182
    %v206 = vcombine.low %v161, %v189
    %v207 = vcombine.high %v161, %v189
    %v208 = vcombine.low %v168, %v196
    %v209 = vcombine.high %v168, %v196
    %v210 = vcombine.low %v175, %v203
    %v211 = vcombine.high %v175, %v203
    %v212 = vcombine.low %v49, %v50
    %v213 = vcombine.high %v49, %v50
    %v214 = vcombine.low %v51, %v52
    %v215 = vcombine.high %v51, %v52
    %v216 = vcombine.low %v53, %v54
    %v217 = vcombine.high %v53, %v54
    %v218 = vcombine.low %v55, %v56
    %v219 = vcombine.high %v55, %v56
    %v221 = vunpack.c.l.s4 1966171168
    %v222 = vunpack.c.0.s8 %v221
    %v223 = vlaneseq
    %v224 = vshrl.u32 %v223, 7
    %v225 = vsub.s32 %v222, %v224
    %v226 = vrot.slane %v212, %v225
    %v228 = vunpack.c.l.s4 1966171168
    %v229 = vunpack.c.0.s8 %v228
    %v230 = vlaneseq
    %v231 = vshrl.u32 %v230, 7
    %v232 = vsub.s32 %v229, %v231
    %v233 = vrot.slane %v213, %v232
    %v235 = vunpack.c.l.s4 1966171168
    %v236 = vunpack.c.0.s8 %v235
    %v237 = vlaneseq
    %v238 = vshrl.u32 %v237, 7
    %v239 = vsub.s32 %v236, %v238
    %v240 = vrot.slane %v214, %v239
    %v242 = vunpack.c.l.s4 1966171168
    %v243 = vunpack.c.0.s8 %v242
    %v244 = vlaneseq
    %v245 = vshrl.u32 %v244, 7
    %v246 = vsub.s32 %v243, %v245
    %v247 = vrot.slane %v215, %v246
    %v249 = vunpack.c.l.s4 1966171168
    %v250 = vunpack.c.0.s8 %v249
    %v251 = vlaneseq
    %v252 = vshrl.u32 %v251, 7
    %v253 = vsub.s32 %v250, %v252
    %v254 = vrot.slane %v216, %v253
    %v256 = vunpack.c.l.s4 1966171168
    %v257 = vunpack.c.0.s8 %v256
    %v258 = vlaneseq
    %v259 = vshrl.u32 %v258, 7
    %v260 = vsub.s32 %v257, %v259
    %v261 = vrot.slane %v217, %v260
    %v263 = vunpack.c.l.s4 1966171168
    %v264 = vunpack.c.0.s8 %v263
    %v265 = vlaneseq
    %v266 = vshrl.u32 %v265, 7
    %v267 = vsub.s32 %v264, %v266
    %v268 = vrot.slane %v218, %v267
    %v270 = vunpack.c.l.s4 1966171168
    %v271 = vunpack.c.0.s8 %v270
    %v272 = vlaneseq
    %v273 = vshrl.u32 %v272, 7
    %v274 = vsub.s32 %v271, %v273
    %v275 = vrot.slane %v219, %v274
    %v276 = vcombine.low %v226, %v240
    %v277 = vcombine.high %v226, %v240
    %v278 = vcombine.low %v233, %v247
    %v279 = vcombine.high %v233, %v247
    %v280 = vcombine.low %v254, %v268
    %v281 = vcombine.high %v254, %v268
    %v282 = vcombine.low %v261, %v275
    %v283 = vcombine.high %v261, %v275
    %v285 = vunpack.c.l.s4 1966171168
    %v286 = vunpack.c.0.s8 %v285
    %v287 = vlaneseq
    %v288 = vshrl.u32 %v287, 7
    %v289 = vsub.s32 %v286, %v288
    %v290 = vrot.slane %v276, %v289
    %v292 = vunpack.c.l.s4 1966171168
    %v293 = vunpack.c.0.s8 %v292
    %v294 = vlaneseq
    %v295 = vshrl.u32 %v294, 7
    %v296 = vsub.s32 %v293, %v295
    %v297 = vrot.slane %v278, %v296
    %v299 = vunpack.c.l.s4 1966171168
    %v300 = vunpack.c.0.s8 %v299
    %v301 = vlaneseq
    %v302 = vshrl.u32 %v301, 7
    %v303 = vsub.s32 %v300, %v302
    %v304 = vrot.slane %v277, %v303
    %v306 = vunpack.c.l.s4 1966171168
    %v307 = vunpack.c.0.s8 %v306
    %v308 = vlaneseq
    %v309 = vshrl.u32 %v308, 7
    %v310 = vsub.s32 %v307, %v309
    %v311 = vrot.slane %v279, %v310
    %v313 = vunpack.c.l.s4 1966171168
    %v314 = vunpack.c.0.s8 %v313
    %v315 = vlaneseq
    %v316 = vshrl.u32 %v315, 7
    %v317 = vsub.s32 %v314, %v316
    %v318 = vrot.slane %v280, %v317
    %v320 = vunpack.c.l.s4 1966171168
    %v321 = vunpack.c.0.s8 %v320
    %v322 = vlaneseq
    %v323 = vshrl.u32 %v322, 7
    %v324 = vsub.s32 %v321, %v323
    %v325 = vrot.slane %v282, %v324
    %v327 = vunpack.c.l.s4 1966171168
    %v328 = vunpack.c.0.s8 %v327
    %v329 = vlaneseq
    %v330 = vshrl.u32 %v329, 7
    %v331 = vsub.s32 %v328, %v330
    %v332 = vrot.slane %v281, %v331
    %v334 = vunpack.c.l.s4 1966171168
    %v335 = vunpack.c.0.s8 %v334
    %v336 = vlaneseq
    %v337 = vshrl.u32 %v336, 7
    %v338 = vsub.s32 %v335, %v337
    %v339 = vrot.slane %v283, %v338
    %v340 = vcombine.low %v290, %v318
    %v341 = vcombine.high %v290, %v318
    %v342 = vcombine.low %v297, %v325
    %v343 = vcombine.high %v297, %v325
    %v344 = vcombine.low %v304, %v332
    %v345 = vcombine.high %v304, %v332
    %v346 = vcombine.low %v311, %v339
    %v347 = vcombine.high %v311, %v339
    %v348 = vlaneseq
    %v349 = vshrl.u32 %v348, 7
    %v350 = vsub.s32 0, %v349
    %v351 = vrot.slane %v204, %v350
    %v352 = vlaneseq
    %v353 = vshrl.u32 %v352, 7
    %v354 = vsub.s32 1, %v353
    %v355 = vrot.slane %v204, %v354
    %v356 = vlaneseq
    %v357 = vshrl.u32 %v356, 7
    %v358 = vsub.s32 2, %v357
    %v359 = vrot.slane %v204, %v358
    %v360 = vlaneseq
    %v361 = vshrl.u32 %v360, 7
    %v362 = vsub.s32 3, %v361
    %v363 = vrot.slane %v204, %v362
    %v364 = vlaneseq
    %v365 = vshrl.u32 %v364, 7
    %v366 = vsub.s32 4, %v365
    %v367 = vrot.slane %v204, %v366
    %v368 = vlaneseq
    %v369 = vshrl.u32 %v368, 7
    %v370 = vsub.s32 5, %v369
    %v371 = vrot.slane %v204, %v370
    %v372 = vlaneseq
    %v373 = vshrl.u32 %v372, 7
    %v374 = vsub.s32 6, %v373
    %v375 = vrot.slane %v204, %v374
    %v376 = vlaneseq
    %v377 = vshrl.u32 %v376, 7
    %v378 = vsub.s32 7, %v377
    %v379 = vrot.slane %v204, %v378
    %v380 = vlaneseq
    %v381 = vshrl.u32 %v380, 7
    %v382 = vsub.s32 0, %v381
    %v383 = vrot.slane %v340, %v382
    %v384 = vlaneseq
    %v385 = vshrl.u32 %v384, 7
    %v386 = vsub.s32 1, %v385
    %v387 = vrot.slane %v340, %v386
    %v388 = vlaneseq
    %v389 = vshrl.u32 %v388, 7
    %v390 = vsub.s32 2, %v389
    %v391 = vrot.slane %v340, %v390
    %v392 = vlaneseq
    %v393 = vshrl.u32 %v392, 7
    %v394 = vsub.s32 3, %v393
    %v395 = vrot.slane %v340, %v394
    %v396 = vlaneseq
    %v397 = vshrl.u32 %v396, 7
    %v398 = vsub.s32 4, %v397
    %v399 = vrot.slane %v340, %v398
    %v400 = vlaneseq
    %v401 = vshrl.u32 %v400, 7
    %v402 = vsub.s32 5, %v401
    %v403 = vrot.slane %v340, %v402
    %v404 = vlaneseq
    %v405 = vshrl.u32 %v404, 7
    %v406 = vsub.s32 6, %v405
    %v407 = vrot.slane %v340, %v406
    %v408 = vlaneseq
    %v409 = vshrl.u32 %v408, 7
    %v410 = vsub.s32 7, %v409
    %v411 = vrot.slane %v340, %v410
    %v412 = vlaneseq
    %v413 = vshrl.u32 %v412, 7
    %v414 = vsub.s32 0, %v413
    %v415 = vrot.slane %v208, %v414
    %v416 = vlaneseq
    %v417 = vshrl.u32 %v416, 7
    %v418 = vsub.s32 1, %v417
    %v419 = vrot.slane %v208, %v418
    %v420 = vlaneseq
    %v421 = vshrl.u32 %v420, 7
    %v422 = vsub.s32 2, %v421
    %v423 = vrot.slane %v208, %v422
    %v424 = vlaneseq
    %v425 = vshrl.u32 %v424, 7
    %v426 = vsub.s32 3, %v425
    %v427 = vrot.slane %v208, %v426
    %v428 = vlaneseq
    %v429 = vshrl.u32 %v428, 7
    %v430 = vsub.s32 4, %v429
    %v431 = vrot.slane %v208, %v430
    %v432 = vlaneseq
    %v433 = vshrl.u32 %v432, 7
    %v434 = vsub.s32 5, %v433
    %v435 = vrot.slane %v208, %v434
    %v436 = vlaneseq
    %v437 = vshrl.u32 %v436, 7
    %v438 = vsub.s32 6, %v437
    %v439 = vrot.slane %v208, %v438
    %v440 = vlaneseq
    %v441 = vshrl.u32 %v440, 7
    %v442 = vsub.s32 7, %v441
    %v443 = vrot.slane %v208, %v442
    %v444 = vlaneseq
    %v445 = vshrl.u32 %v444, 7
    %v446 = vsub.s32 0, %v445
    %v447 = vrot.slane %v344, %v446
    %v448 = vlaneseq
    %v449 = vshrl.u32 %v448, 7
    %v450 = vsub.s32 1, %v449
    %v451 = vrot.slane %v344, %v450
    %v452 = vlaneseq
    %v453 = vshrl.u32 %v452, 7
    %v454 = vsub.s32 2, %v453
    %v455 = vrot.slane %v344, %v454
    %v456 = vlaneseq
    %v457 = vshrl.u32 %v456, 7
    %v458 = vsub.s32 3, %v457
    %v459 = vrot.slane %v344, %v458
    %v460 = vlaneseq
    %v461 = vshrl.u32 %v460, 7
    %v462 = vsub.s32 4, %v461
    %v463 = vrot.slane %v344, %v462
    %v464 = vlaneseq
    %v465 = vshrl.u32 %v464, 7
    %v466 = vsub.s32 5, %v465
    %v467 = vrot.slane %v344, %v466
    %v468 = vlaneseq
    %v469 = vshrl.u32 %v468, 7
    %v470 = vsub.s32 6, %v469
    %v471 = vrot.slane %v344, %v470
    %v472 = vlaneseq
    %v473 = vshrl.u32 %v472, 7
    %v474 = vsub.s32 7, %v473
    %v475 = vrot.slane %v344, %v474
    %v476 = vlaneseq
    %v477 = vshrl.u32 %v476, 7
    %v478 = vsub.s32 0, %v477
    %v479 = vrot.slane %v205, %v478
    %v480 = vlaneseq
    %v481 = vshrl.u32 %v480, 7
    %v482 = vsub.s32 1, %v481
    %v483 = vrot.slane %v205, %v482
    %v484 = vlaneseq
    %v485 = vshrl.u32 %v484, 7
    %v486 = vsub.s32 2, %v485
    %v487 = vrot.slane %v205, %v486
    %v488 = vlaneseq
    %v489 = vshrl.u32 %v488, 7
    %v490 = vsub.s32 3, %v489
    %v491 = vrot.slane %v205, %v490
    %v492 = vlaneseq
    %v493 = vshrl.u32 %v492, 7
    %v494 = vsub.s32 4, %v493
    %v495 = vrot.slane %v205, %v494
    %v496 = vlaneseq
    %v497 = vshrl.u32 %v496, 7
    %v498 = vsub.s32 5, %v497
    %v499 = vrot.slane %v205, %v498
    %v500 = vlaneseq
    %v501 = vshrl.u32 %v500, 7
    %v502 = vsub.s32 6, %v501
    %v503 = vrot.slane %v205, %v502
    %v504 = vlaneseq
    %v505 = vshrl.u32 %v504, 7
    %v506 = vsub.s32 7, %v505
    %v507 = vrot.slane %v205, %v506
    %v508 = vlaneseq
    %v509 = vshrl.u32 %v508, 7
    %v510 = vsub.s32 0, %v509
    %v511 = vrot.slane %v341, %v510
    %v512 = vlaneseq
    %v513 = vshrl.u32 %v512, 7
    %v514 = vsub.s32 1, %v513
    %v515 = vrot.slane %v341, %v514
    %v516 = vlaneseq
    %v517 = vshrl.u32 %v516, 7
    %v518 = vsub.s32 2, %v517
    %v519 = vrot.slane %v341, %v518
    %v520 = vlaneseq
    %v521 = vshrl.u32 %v520, 7
    %v522 = vsub.s32 3, %v521
    %v523 = vrot.slane %v341, %v522
    %v524 = vlaneseq
    %v525 = vshrl.u32 %v524, 7
    %v526 = vsub.s32 4, %v525
    %v527 = vrot.slane %v341, %v526
    %v528 = vlaneseq
    %v529 = vshrl.u32 %v528, 7
    %v530 = vsub.s32 5, %v529
    %v531 = vrot.slane %v341, %v530
    %v532 = vlaneseq
    %v533 = vshrl.u32 %v532, 7
    %v534 = vsub.s32 6, %v533
    %v535 = vrot.slane %v341, %v534
    %v536 = vlaneseq
    %v537 = vshrl.u32 %v536, 7
    %v538 = vsub.s32 7, %v537
    %v539 = vrot.slane %v341, %v538
    %v540 = vlaneseq
    %v541 = vshrl.u32 %v540, 7
    %v542 = vsub.s32 0, %v541
    %v543 = vrot.slane %v209, %v542
    %v544 = vlaneseq
    %v545 = vshrl.u32 %v544, 7
    %v546 = vsub.s32 1, %v545
    %v547 = vrot.slane %v209, %v546
    %v548 = vlaneseq
    %v549 = vshrl.u32 %v548, 7
    %v550 = vsub.s32 2, %v549
    %v551 = vrot.slane %v209, %v550
    %v552 = vlaneseq
    %v553 = vshrl.u32 %v552, 7
    %v554 = vsub.s32 3, %v553
    %v555 = vrot.slane %v209, %v554
    %v556 = vlaneseq
    %v557 = vshrl.u32 %v556, 7
    %v558 = vsub.s32 4, %v557
    %v559 = vrot.slane %v209, %v558
    %v560 = vlaneseq
    %v561 = vshrl.u32 %v560, 7
    %v562 = vsub.s32 5, %v561
    %v563 = vrot.slane %v209, %v562
    %v564 = vlaneseq
    %v565 = vshrl.u32 %v564, 7
    %v566 = vsub.s32 6, %v565
    %v567 = vrot.slane %v209, %v566
    %v568 = vlaneseq
    %v569 = vshrl.u32 %v568, 7
    %v570 = vsub.s32 7, %v569
    %v571 = vrot.slane %v209, %v570
    %v572 = vlaneseq
    %v573 = vshrl.u32 %v572, 7
    %v574 = vsub.s32 0, %v573
    %v575 = vrot.slane %v345, %v574
    %v576 = vlaneseq
    %v577 = vshrl.u32 %v576, 7
    %v578 = vsub.s32 1, %v577
    %v579 = vrot.slane %v345, %v578
    %v580 = vlaneseq
    %v581 = vshrl.u32 %v580, 7
    %v582 = vsub.s32 2, %v581
    %v583 = vrot.slane %v345, %v582
    %v584 = vlaneseq
    %v585 = vshrl.u32 %v584, 7
    %v586 = vsub.s32 3, %v585
    %v587 = vrot.slane %v345, %v586
    %v588 = vlaneseq
    %v589 = vshrl.u32 %v588, 7
    %v590 = vsub.s32 4, %v589
    %v591 = vrot.slane %v345, %v590
    %v592 = vlaneseq
    %v593 = vshrl.u32 %v592, 7
    %v594 = vsub.s32 5, %v593
    %v595 = vrot.slane %v345, %v594
    %v596 = vlaneseq
    %v597 = vshrl.u32 %v596, 7
    %v598 = vsub.s32 6, %v597
    %v599 = vrot.slane %v345, %v598
    %v600 = vlaneseq
    %v601 = vshrl.u32 %v600, 7
    %v602 = vsub.s32 7, %v601
    %v603 = vrot.slane %v345, %v602
    %v604 = vlaneseq
    %v605 = vshrl.u32 %v604, 7
    %v606 = vsub.s32 0, %v605
    %v607 = vrot.slane %v206, %v606
    %v608 = vlaneseq
    %v609 = vshrl.u32 %v608, 7
    %v610 = vsub.s32 1, %v609
    %v611 = vrot.slane %v206, %v610
    %v612 = vlaneseq
    %v613 = vshrl.u32 %v612, 7
    %v614 = vsub.s32 2, %v613
    %v615 = vrot.slane %v206, %v614
    %v616 = vlaneseq
    %v617 = vshrl.u32 %v616, 7
    %v618 = vsub.s32 3, %v617
    %v619 = vrot.slane %v206, %v618
    %v620 = vlaneseq
    %v621 = vshrl.u32 %v620, 7
    %v622 = vsub.s32 4, %v621
    %v623 = vrot.slane %v206, %v622
    %v624 = vlaneseq
    %v625 = vshrl.u32 %v624, 7
    %v626 = vsub.s32 5, %v625
    %v627 = vrot.slane %v206, %v626
    %v628 = vlaneseq
    %v629 = vshrl.u32 %v628, 7
    %v630 = vsub.s32 6, %v629
    %v631 = vrot.slane %v206, %v630
    %v632 = vlaneseq
    %v633 = vshrl.u32 %v632, 7
    %v634 = vsub.s32 7, %v633
    %v635 = vrot.slane %v206, %v634
    %v636 = vlaneseq
    %v637 = vshrl.u32 %v636, 7
    %v638 = vsub.s32 0, %v637
    %v639 = vrot.slane %v342, %v638
    %v640 = vlaneseq
    %v641 = vshrl.u32 %v640, 7
    %v642 = vsub.s32 1, %v641
    %v643 = vrot.slane %v342, %v642
    %v644 = vlaneseq
    %v645 = vshrl.u32 %v644, 7
    %v646 = vsub.s32 2, %v645
    %v647 = vrot.slane %v342, %v646
    %v648 = vlaneseq
    %v649 = vshrl.u32 %v648, 7
    %v650 = vsub.s32 3, %v649
    %v651 = vrot.slane %v342, %v650
    %v652 = vlaneseq
    %v653 = vshrl.u32 %v652, 7
    %v654 = vsub.s32 4, %v653
    %v655 = vrot.slane %v342, %v654
    %v656 = vlaneseq
    %v657 = vshrl.u32 %v656, 7
    %v658 = vsub.s32 5, %v657
    %v659 = vrot.slane %v342, %v658
    %v660 = vlaneseq
    %v661 = vshrl.u32 %v660, 7
    %v662 = vsub.s32 6, %v661
    %v663 = vrot.slane %v342, %v662
    %v664 = vlaneseq
    %v665 = vshrl.u32 %v664, 7
    %v666 = vsub.s32 7, %v665
    %v667 = vrot.slane %v342, %v666
    %v668 = vlaneseq
    %v669 = vshrl.u32 %v668, 7
    %v670 = vsub.s32 0, %v669
    %v671 = vrot.slane %v210, %v670
    %v672 = vlaneseq
    %v673 = vshrl.u32 %v672, 7
    %v674 = vsub.s32 1, %v673
    %v675 = vrot.slane %v210, %v674
    %v676 = vlaneseq
    %v677 = vshrl.u32 %v676, 7
    %v678 = vsub.s32 2, %v677
    %v679 = vrot.slane %v210, %v678
    %v680 = vlaneseq
    %v681 = vshrl.u32 %v680, 7
    %v682 = vsub.s32 3, %v681
    %v683 = vrot.slane %v210, %v682
    %v684 = vlaneseq
    %v685 = vshrl.u32 %v684, 7
    %v686 = vsub.s32 4, %v685
    %v687 = vrot.slane %v210, %v686
    %v688 = vlaneseq
    %v689 = vshrl.u32 %v688, 7
    %v690 = vsub.s32 5, %v689
    %v691 = vrot.slane %v210, %v690
    %v692 = vlaneseq
    %v693 = vshrl.u32 %v692, 7
    %v694 = vsub.s32 6, %v693
    %v695 = vrot.slane %v210, %v694
    %v696 = vlaneseq
    %v697 = vshrl.u32 %v696, 7
    %v698 = vsub.s32 7, %v697
    %v699 = vrot.slane %v210, %v698
    %v700 = vlaneseq
    %v701 = vshrl.u32 %v700, 7
    %v702 = vsub.s32 0, %v701
    %v703 = vrot.slane %v346, %v702
    %v704 = vlaneseq
    %v705 = vshrl.u32 %v704, 7
    %v706 = vsub.s32 1, %v705
    %v707 = vrot.slane %v346, %v706
    %v708 = vlaneseq
    %v709 = vshrl.u32 %v708, 7
    %v710 = vsub.s32 2, %v709
    %v711 = vrot.slane %v346, %v710
    %v712 = vlaneseq
    %v713 = vshrl.u32 %v712, 7
    %v714 = vsub.s32 3, %v713
    %v715 = vrot.slane %v346, %v714
    %v716 = vlaneseq
    %v717 = vshrl.u32 %v716, 7
    %v718 = vsub.s32 4, %v717
    %v719 = vrot.slane %v346, %v718
    %v720 = vlaneseq
    %v721 = vshrl.u32 %v720, 7
    %v722 = vsub.s32 5, %v721
    %v723 = vrot.slane %v346, %v722
    %v724 = vlaneseq
    %v725 = vshrl.u32 %v724, 7
    %v726 = vsub.s32 6, %v725
    %v727 = vrot.slane %v346, %v726
    %v728 = vlaneseq
    %v729 = vshrl.u32 %v728, 7
    %v730 = vsub.s32 7, %v729
    %v731 = vrot.slane %v346, %v730
    %v732 = vlaneseq
    %v733 = vshrl.u32 %v732, 7
    %v734 = vsub.s32 0, %v733
    %v735 = vrot.slane %v207, %v734
    %v736 = vlaneseq
    %v737 = vshrl.u32 %v736, 7
    %v738 = vsub.s32 1, %v737
    %v739 = vrot.slane %v207, %v738
    %v740 = vlaneseq
    %v741 = vshrl.u32 %v740, 7
    %v742 = vsub.s32 2, %v741
    %v743 = vrot.slane %v207, %v742
    %v744 = vlaneseq
    %v745 = vshrl.u32 %v744, 7
    %v746 = vsub.s32 3, %v745
    %v747 = vrot.slane %v207, %v746
    %v748 = vlaneseq
    %v749 = vshrl.u32 %v748, 7
    %v750 = vsub.s32 4, %v749
    %v751 = vrot.slane %v207, %v750
    %v752 = vlaneseq
    %v753 = vshrl.u32 %v752, 7
    %v754 = vsub.s32 5, %v753
    %v755 = vrot.slane %v207, %v754
    %v756 = vlaneseq
    %v757 = vshrl.u32 %v756, 7
    %v758 = vsub.s32 6, %v757
    %v759 = vrot.slane %v207, %v758
    %v760 = vlaneseq
    %v761 = vshrl.u32 %v760, 7
    %v762 = vsub.s32 7, %v761
    %v763 = vrot.slane %v207, %v762
    %v764 = vlaneseq
    %v765 = vshrl.u32 %v764, 7
    %v766 = vsub.s32 0, %v765
    %v767 = vrot.slane %v343, %v766
    %v768 = vlaneseq
    %v769 = vshrl.u32 %v768, 7
    %v770 = vsub.s32 1, %v769
    %v771 = vrot.slane %v343, %v770
    %v772 = vlaneseq
    %v773 = vshrl.u32 %v772, 7
    %v774 = vsub.s32 2, %v773
    %v775 = vrot.slane %v343, %v774
    %v776 = vlaneseq
    %v777 = vshrl.u32 %v776, 7
    %v778 = vsub.s32 3, %v777
    %v779 = vrot.slane %v343, %v778
    %v780 = vlaneseq
    %v781 = vshrl.u32 %v780, 7
    %v782 = vsub.s32 4, %v781
    %v783 = vrot.slane %v343, %v782
    %v784 = vlaneseq
    %v785 = vshrl.u32 %v784, 7
    %v786 = vsub.s32 5, %v785
    %v787 = vrot.slane %v343, %v786
    %v788 = vlaneseq
    %v789 = vshrl.u32 %v788, 7
    %v790 = vsub.s32 6, %v789
    %v791 = vrot.slane %v343, %v790
    %v792 = vlaneseq
    %v793 = vshrl.u32 %v792, 7
    %v794 = vsub.s32 7, %v793
    %v795 = vrot.slane %v343, %v794
    %v796 = vlaneseq
    %v797 = vshrl.u32 %v796, 7
    %v798 = vsub.s32 0, %v797
    %v799 = vrot.slane %v211, %v798
    %v800 = vlaneseq
    %v801 = vshrl.u32 %v800, 7
    %v802 = vsub.s32 1, %v801
    %v803 = vrot.slane %v211, %v802
    %v804 = vlaneseq
    %v805 = vshrl.u32 %v804, 7
    %v806 = vsub.s32 2, %v805
    %v807 = vrot.slane %v211, %v806
    %v808 = vlaneseq
    %v809 = vshrl.u32 %v808, 7
    %v810 = vsub.s32 3, %v809
    %v811 = vrot.slane %v211, %v810
    %v812 = vlaneseq
    %v813 = vshrl.u32 %v812, 7
    %v814 = vsub.s32 4, %v813
    %v815 = vrot.slane %v211, %v814
    %v816 = vlaneseq
    %v817 = vshrl.u32 %v816, 7
    %v818 = vsub.s32 5, %v817
    %v819 = vrot.slane %v211, %v818
    %v820 = vlaneseq
    %v821 = vshrl.u32 %v820, 7
    %v822 = vsub.s32 6, %v821
    %v823 = vrot.slane %v211, %v822
    %v824 = vlaneseq
    %v825 = vshrl.u32 %v824, 7
    %v826 = vsub.s32 7, %v825
    %v827 = vrot.slane %v211, %v826
    %v828 = vlaneseq
    %v829 = vshrl.u32 %v828, 7
    %v830 = vsub.s32 0, %v829
    %v831 = vrot.slane %v347, %v830
    %v832 = vlaneseq
    %v833 = vshrl.u32 %v832, 7
    %v834 = vsub.s32 1, %v833
    %v835 = vrot.slane %v347, %v834
    %v836 = vlaneseq
    %v837 = vshrl.u32 %v836, 7
    %v838 = vsub.s32 2, %v837
    %v839 = vrot.slane %v347, %v838
    %v840 = vlaneseq
    %v841 = vshrl.u32 %v840, 7
    %v842 = vsub.s32 3, %v841
    %v843 = vrot.slane %v347, %v842
    %v844 = vlaneseq
    %v845 = vshrl.u32 %v844, 7
    %v846 = vsub.s32 4, %v845
    %v847 = vrot.slane %v347, %v846
    %v848 = vlaneseq
    %v849 = vshrl.u32 %v848, 7
    %v850 = vsub.s32 5, %v849
    %v851 = vrot.slane %v347, %v850
    %v852 = vlaneseq
    %v853 = vshrl.u32 %v852, 7
    %v854 = vsub.s32 6, %v853
    %v855 = vrot.slane %v347, %v854
    %v856 = vlaneseq
    %v857 = vshrl.u32 %v856, 7
    %v858 = vsub.s32 7, %v857
    %v859 = vrot.slane %v347, %v858
    %v988 = vmul.f32 %v351, %v41
    %v989 = vmul.f32 %v355, %v42
    %v990 = vmul.f32 %v359, %v43
    %v991 = vmul.f32 %v363, %v44
    %v992 = vmul.f32 %v367, %v45
    %v993 = vmul.f32 %v371, %v46
    %v994 = vmul.f32 %v375, %v47
    %v995 = vmul.f32 %v379, %v48
    %v996 = vmul.f32 %v383, %v49
    %v997 = vmul.f32 %v387, %v50
    %v998 = vmul.f32 %v391, %v51
    %v999 = vmul.f32 %v395, %v52
    %v1000 = vmul.f32 %v399, %v53
    %v1001 = vmul.f32 %v403, %v54
    %v1002 = vmul.f32 %v407, %v55
    %v1003 = vmul.f32 %v411, %v56
    %v1004 = vmul.f32 %v415, %v41
    %v1005 = vmul.f32 %v419, %v42
    %v1006 = vmul.f32 %v423, %v43
    %v1007 = vmul.f32 %v427, %v44
    %v1008 = vmul.f32 %v431, %v45
    %v1009 = vmul.f32 %v435, %v46
    %v1010 = vmul.f32 %v439, %v47
    %v1011 = vmul.f32 %v443, %v48
    %v1012 = vmul.f32 %v447, %v49
    %v1013 = vmul.f32 %v451, %v50
    %v1014 = vmul.f32 %v455, %v51
    %v1015 = vmul.f32 %v459, %v52
    %v1016 = vmul.f32 %v463, %v53
    %v1017 = vmul.f32 %v467, %v54
    %v1018 = vmul.f32 %v471, %v55
    %v1019 = vmul.f32 %v475, %v56
    %v1020 = vmul.f32 %v479, %v41
    %v1021 = vmul.f32 %v483, %v42
    %v1022 = vmul.f32 %v487, %v43
    %v1023 = vmul.f32 %v491, %v44
    %v1024 = vmul.f32 %v495, %v45
    %v1025 = vmul.f32 %v499, %v46
    %v1026 = vmul.f32 %v503, %v47
    %v1027 = vmul.f32 %v507, %v48
    %v1028 = vmul.f32 %v511, %v49
    %v1029 = vmul.f32 %v515, %v50
    %v1030 = vmul.f32 %v519, %v51
    %v1031 = vmul.f32 %v523, %v52
    %v1032 = vmul.f32 %v527, %v53
    %v1033 = vmul.f32 %v531, %v54
    %v1034 = vmul.f32 %v535, %v55
    %v1035 = vmul.f32 %v539, %v56
    %v1036 = vmul.f32 %v543, %v41
    %v1037 = vmul.f32 %v547, %v42
    %v1038 = vmul.f32 %v551, %v43
    %v1039 = vmul.f32 %v555, %v44
    %v1040 = vmul.f32 %v559, %v45
    %v1041 = vmul.f32 %v563, %v46
    %v1042 = vmul.f32 %v567, %v47
    %v1043 = vmul.f32 %v571, %v48
    %v1044 = vmul.f32 %v575, %v49
    %v1045 = vmul.f32 %v579, %v50
    %v1046 = vmul.f32 %v583, %v51
    %v1047 = vmul.f32 %v587, %v52
    %v1048 = vmul.f32 %v591, %v53
    %v1049 = vmul.f32 %v595, %v54
    %v1050 = vmul.f32 %v599, %v55
    %v1051 = vmul.f32 %v603, %v56
    %v1052 = vmul.f32 %v607, %v41
    %v1053 = vmul.f32 %v611, %v42
    %v1054 = vmul.f32 %v615, %v43
    %v1055 = vmul.f32 %v619, %v44
    %v1056 = vmul.f32 %v623, %v45
    %v1057 = vmul.f32 %v627, %v46
    %v1058 = vmul.f32 %v631, %v47
    %v1059 = vmul.f32 %v635, %v48
    %v1060 = vmul.f32 %v639, %v49
    %v1061 = vmul.f32 %v643, %v50
    %v1062 = vmul.f32 %v647, %v51
    %v1063 = vmul.f32 %v651, %v52
    %v1064 = vmul.f32 %v655, %v53
    %v1065 = vmul.f32 %v659, %v54
    %v1066 = vmul.f32 %v663, %v55
    %v1067 = vmul.f32 %v667, %v56
    %v1068 = vmul.f32 %v671, %v41
    %v1069 = vmul.f32 %v675, %v42
    %v1070 = vmul.f32 %v679, %v43
    %v1071 = vmul.f32 %v683, %v44
    %v1072 = vmul.f32 %v687, %v45
    %v1073 = vmul.f32 %v691, %v46
    %v1074 = vmul.f32 %v695, %v47
    %v1075 = vmul.f32 %v699, %v48
    %v1076 = vmul.f32 %v703, %v49
    %v1077 = vmul.f32 %v707, %v50
    %v1078 = vmul.f32 %v711, %v51
    %v1079 = vmul.f32 %v715, %v52
    %v1080 = vmul.f32 %v719, %v53
    %v1081 = vmul.f32 %v723, %v54
    %v1082 = vmul.f32 %v727, %v55
    %v1083 = vmul.f32 %v731, %v56
    %v1084 = vmul.f32 %v735, %v41
    %v1085 = vmul.f32 %v739, %v42
    %v1086 = vmul.f32 %v743, %v43
    %v1087 = vmul.f32 %v747, %v44
    %v1088 = vmul.f32 %v751, %v45
    %v1089 = vmul.f32 %v755, %v46
    %v1090 = vmul.f32 %v759, %v47
    %v1091 = vmul.f32 %v763, %v48
    %v1092 = vmul.f32 %v767, %v49
    %v1093 = vmul.f32 %v771, %v50
    %v1094 = vmul.f32 %v775, %v51
    %v1095 = vmul.f32 %v779, %v52
    %v1096 = vmul.f32 %v783, %v53
    %v1097 = vmul.f32 %v787, %v54
    %v1098 = vmul.f32 %v791, %v55
    %v1099 = vmul.f32 %v795, %v56
    %v1100 = vmul.f32 %v799, %v41
    %v1101 = vmul.f32 %v803, %v42
    %v1102 = vmul.f32 %v807, %v43
    %v1103 = vmul.f32 %v811, %v44
    %v1104 = vmul.f32 %v815, %v45
    %v1105 = vmul.f32 %v819, %v46
    %v1106 = vmul.f32 %v823, %v47
    %v1107 = vmul.f32 %v827, %v48
    %v1108 = vmul.f32 %v831, %v49
    %v1109 = vmul.f32 %v835, %v50
    %v1110 = vmul.f32 %v839, %v51
    %v1111 = vmul.f32 %v843, %v52
    %v1112 = vmul.f32 %v847, %v53
    %v1113 = vmul.f32 %v851, %v54
    %v1114 = vmul.f32 %v855, %v55
    %v1115 = vmul.f32 %v859, %v56
    %1117 = vset.pattern.permute.xlu0 0
    %1118 = vperm.xlu0 %1117, %v59
    %v1119 = vpop.permute.xlu0 %1118
    %vm1121 = vcmask 523264
    %v1123 = vsel %vm1121, %v58, 0
    %1125 = vmatprep.subr.mxu0 0.0
    %1126 = vmatpush1.msra.mxu0 0.0
    %1127 = vmatprep.subr.mxu0 0.0
    %1128 = vmatpush1.msra.mxu0 0.0
    %1129 = vmatprep.subr.mxu0 0.0
    %1130 = vmatpush1.msra.mxu0 0.0
    %1131 = vmatprep.subr.mxu0 0.0
    %1132 = vmatpush1.msra.mxu0 0.0
    %1133 = vmatprep.subr.mxu0 0.0
    %1134 = vmatpush1.msra.mxu0 0.0
    %1135 = vmatprep.subr.mxu0 0.0
    %1136 = vmatpush1.msra.mxu0 0.0
    %1137 = vmatprep.subr.mxu0 0.0
    %1138 = vmatpush1.msra.mxu0 0.0
    %1139 = vmatprep.subr.mxu0 0.0
    %1140 = vmatpush1.msra.mxu0 0.0
    %1141 = vmatprep.subr.mxu0 %v1101
    %1142 = vmatpush1.msra.mxu0 %v1100
    %1143 = vmatprep.subr.mxu0 %v1085
    %1144 = vmatpush1.msra.mxu0 %v1084
    %1145 = vmatprep.subr.mxu0 %v1069
    %1146 = vmatpush1.msra.mxu0 %v1068
    %1147 = vmatprep.subr.mxu0 %v1053
    %1148 = vmatpush1.msra.mxu0 %v1052
    %1149 = vmatprep.subr.mxu0 %v1037
    %1150 = vmatpush1.msra.mxu0 %v1036
    %1151 = vmatprep.subr.mxu0 %v1021
    %1152 = vmatpush1.msra.mxu0 %v1020
    %1153 = vmatprep.subr.mxu0 %v1005
    %1154 = vmatpush1.msra.mxu0 %v1004
    %1155 = vmatprep.subr.mxu0 %v989
    %1156 = vmatpush1.msra.mxu0 %v988
    %1157 = vmatprep.subr.mxu0 0.0
    %1158 = vmatpush2.msra.mxu0 0.0
    %1159 = vmatprep.subr.mxu0 0.0
    %1160 = vmatpush2.msra.mxu0 0.0
    %1161 = vmatprep.subr.mxu0 0.0
    %1162 = vmatpush2.msra.mxu0 0.0
    %1163 = vmatprep.subr.mxu0 0.0
    %1164 = vmatpush2.msra.mxu0 0.0
    %1165 = vmatprep.subr.mxu0 0.0
    %1166 = vmatpush2.msra.mxu0 0.0
    %1167 = vmatprep.subr.mxu0 0.0
    %1168 = vmatpush2.msra.mxu0 0.0
    %1169 = vmatprep.subr.mxu0 0.0
    %1170 = vmatpush2.msra.mxu0 0.0
    %1171 = vmatprep.subr.mxu0 0.0
    %1172 = vmatpush2.msra.mxu0 0.0
    %1173 = vmatprep.subr.mxu0 0.0
    %1174 = vmatpush2.msra.mxu0 0.0
    %1175 = vmatprep.subr.mxu0 0.0
    %1176 = vmatpush2.msra.mxu0 0.0
    %1177 = vmatprep.subr.mxu0 0.0
    %1178 = vmatpush2.msra.mxu0 0.0
    %1179 = vmatprep.subr.mxu0 0.0
    %1180 = vmatpush2.msra.mxu0 0.0
    %1181 = vmatprep.subr.mxu0 0.0
    %1182 = vmatpush2.msra.mxu0 0.0
    %1183 = vmatprep.subr.mxu0 0.0
    %1184 = vmatpush2.msra.mxu0 0.0
    %1185 = vmatprep.subr.mxu0 0.0
    %1186 = vmatpush2.msra.mxu0 0.0
    %1187 = vmatprep.subr.mxu0 0.0
    %1188 = vmatpush2.msra.mxu0 0.0
    %1189 = vmatprep.mubr.f32.mxu0 0.0
    %1190 = vmatmul.mubr.f32.gmra.mxu0 %v1123
    %v1191 = vpop.f32.mrf.mxu0
    %v1192 = vadd.f32 %v1119, %v1191
    %v1193 = vpop.f32.mrf.mxu0
    %v1194 = vadd.f32 %v1119, %v1193
    %1195 = vdwg.mxu0
    %1196 = vmatprep.subr.mxu0 0.0
    %1197 = vmatpush1.msra.mxu0 0.0
    %1198 = vmatprep.subr.mxu0 0.0
    %1199 = vmatpush1.msra.mxu0 0.0
    %1200 = vmatprep.subr.mxu0 0.0
    %1201 = vmatpush1.msra.mxu0 0.0
    %1202 = vmatprep.subr.mxu0 0.0
    %1203 = vmatpush1.msra.mxu0 0.0
    %1204 = vmatprep.subr.mxu0 0.0
    %1205 = vmatpush1.msra.mxu0 0.0
    %1206 = vmatprep.subr.mxu0 0.0
    %1207 = vmatpush1.msra.mxu0 0.0
    %1208 = vmatprep.subr.mxu0 0.0
    %1209 = vmatpush1.msra.mxu0 0.0
    %1210 = vmatprep.subr.mxu0 0.0
    %1211 = vmatpush1.msra.mxu0 0.0
    %1212 = vmatprep.subr.mxu0 %v1103
    %1213 = vmatpush1.msra.mxu0 %v1102
    %1214 = vmatprep.subr.mxu0 %v1087
    %1215 = vmatpush1.msra.mxu0 %v1086
    %1216 = vmatprep.subr.mxu0 %v1071
    %1217 = vmatpush1.msra.mxu0 %v1070
    %1218 = vmatprep.subr.mxu0 %v1055
    %1219 = vmatpush1.msra.mxu0 %v1054
    %1220 = vmatprep.subr.mxu0 %v1039
    %1221 = vmatpush1.msra.mxu0 %v1038
    %1222 = vmatprep.subr.mxu0 %v1023
    %1223 = vmatpush1.msra.mxu0 %v1022
    %1224 = vmatprep.subr.mxu0 %v1007
    %1225 = vmatpush1.msra.mxu0 %v1006
    %1226 = vmatprep.subr.mxu0 %v991
    %1227 = vmatpush1.msra.mxu0 %v990
    %1228 = vmatprep.subr.mxu0 0.0
    %1229 = vmatpush2.msra.mxu0 0.0
    %1230 = vmatprep.subr.mxu0 0.0
    %1231 = vmatpush2.msra.mxu0 0.0
    %1232 = vmatprep.subr.mxu0 0.0
    %1233 = vmatpush2.msra.mxu0 0.0
    %1234 = vmatprep.subr.mxu0 0.0
    %1235 = vmatpush2.msra.mxu0 0.0
    %1236 = vmatprep.subr.mxu0 0.0
    %1237 = vmatpush2.msra.mxu0 0.0
    %1238 = vmatprep.subr.mxu0 0.0
    %1239 = vmatpush2.msra.mxu0 0.0
    %1240 = vmatprep.subr.mxu0 0.0
    %1241 = vmatpush2.msra.mxu0 0.0
    %1242 = vmatprep.subr.mxu0 0.0
    %1243 = vmatpush2.msra.mxu0 0.0
    %1244 = vmatprep.subr.mxu0 0.0
    %1245 = vmatpush2.msra.mxu0 0.0
    %1246 = vmatprep.subr.mxu0 0.0
    %1247 = vmatpush2.msra.mxu0 0.0
    %1248 = vmatprep.subr.mxu0 0.0
    %1249 = vmatpush2.msra.mxu0 0.0
    %1250 = vmatprep.subr.mxu0 0.0
    %1251 = vmatpush2.msra.mxu0 0.0
    %1252 = vmatprep.subr.mxu0 0.0
    %1253 = vmatpush2.msra.mxu0 0.0
    %1254 = vmatprep.subr.mxu0 0.0
    %1255 = vmatpush2.msra.mxu0 0.0
    %1256 = vmatprep.subr.mxu0 0.0
    %1257 = vmatpush2.msra.mxu0 0.0
    %1258 = vmatprep.subr.mxu0 0.0
    %1259 = vmatpush2.msra.mxu0 0.0
    %1260 = vmatprep.mubr.f32.mxu0 0.0
    %1261 = vmatmul.mubr.f32.gmra.mxu0 %v1123
    %v1262 = vpop.f32.mrf.mxu0
    %v1263 = vadd.f32 %v1119, %v1262
    %v1264 = vpop.f32.mrf.mxu0
    %v1265 = vadd.f32 %v1119, %v1264
    %1266 = vdwg.mxu0
    %1267 = vmatprep.subr.mxu0 0.0
    %1268 = vmatpush1.msra.mxu0 0.0
    %1269 = vmatprep.subr.mxu0 0.0
    %1270 = vmatpush1.msra.mxu0 0.0
    %1271 = vmatprep.subr.mxu0 0.0
    %1272 = vmatpush1.msra.mxu0 0.0
    %1273 = vmatprep.subr.mxu0 0.0
    %1274 = vmatpush1.msra.mxu0 0.0
    %1275 = vmatprep.subr.mxu0 0.0
    %1276 = vmatpush1.msra.mxu0 0.0
    %1277 = vmatprep.subr.mxu0 0.0
    %1278 = vmatpush1.msra.mxu0 0.0
    %1279 = vmatprep.subr.mxu0 0.0
    %1280 = vmatpush1.msra.mxu0 0.0
    %1281 = vmatprep.subr.mxu0 0.0
    %1282 = vmatpush1.msra.mxu0 0.0
    %1283 = vmatprep.subr.mxu0 %v1105
    %1284 = vmatpush1.msra.mxu0 %v1104
    %1285 = vmatprep.subr.mxu0 %v1089
    %1286 = vmatpush1.msra.mxu0 %v1088
    %1287 = vmatprep.subr.mxu0 %v1073
    %1288 = vmatpush1.msra.mxu0 %v1072
    %1289 = vmatprep.subr.mxu0 %v1057
    %1290 = vmatpush1.msra.mxu0 %v1056
    %1291 = vmatprep.subr.mxu0 %v1041
    %1292 = vmatpush1.msra.mxu0 %v1040
    %1293 = vmatprep.subr.mxu0 %v1025
    %1294 = vmatpush1.msra.mxu0 %v1024
    %1295 = vmatprep.subr.mxu0 %v1009
    %1296 = vmatpush1.msra.mxu0 %v1008
    %1297 = vmatprep.subr.mxu0 %v993
    %1298 = vmatpush1.msra.mxu0 %v992
    %1299 = vmatprep.subr.mxu0 0.0
    %1300 = vmatpush2.msra.mxu0 0.0
    %1301 = vmatprep.subr.mxu0 0.0
    %1302 = vmatpush2.msra.mxu0 0.0
    %1303 = vmatprep.subr.mxu0 0.0
    %1304 = vmatpush2.msra.mxu0 0.0
    %1305 = vmatprep.subr.mxu0 0.0
    %1306 = vmatpush2.msra.mxu0 0.0
    %1307 = vmatprep.subr.mxu0 0.0
    %1308 = vmatpush2.msra.mxu0 0.0
    %1309 = vmatprep.subr.mxu0 0.0
    %1310 = vmatpush2.msra.mxu0 0.0
    %1311 = vmatprep.subr.mxu0 0.0
    %1312 = vmatpush2.msra.mxu0 0.0
    %1313 = vmatprep.subr.mxu0 0.0
    %1314 = vmatpush2.msra.mxu0 0.0
    %1315 = vmatprep.subr.mxu0 0.0
    %1316 = vmatpush2.msra.mxu0 0.0
    %1317 = vmatprep.subr.mxu0 0.0
    %1318 = vmatpush2.msra.mxu0 0.0
    %1319 = vmatprep.subr.mxu0 0.0
    %1320 = vmatpush2.msra.mxu0 0.0
    %1321 = vmatprep.subr.mxu0 0.0
    %1322 = vmatpush2.msra.mxu0 0.0
    %1323 = vmatprep.subr.mxu0 0.0
    %1324 = vmatpush2.msra.mxu0 0.0
    %1325 = vmatprep.subr.mxu0 0.0
    %1326 = vmatpush2.msra.mxu0 0.0
    %1327 = vmatprep.subr.mxu0 0.0
    %1328 = vmatpush2.msra.mxu0 0.0
    %1329 = vmatprep.subr.mxu0 0.0
    %1330 = vmatpush2.msra.mxu0 0.0
    %1331 = vmatprep.mubr.f32.mxu0 0.0
    %1332 = vmatmul.mubr.f32.gmra.mxu0 %v1123
    %v1333 = vpop.f32.mrf.mxu0
    %v1334 = vadd.f32 %v1119, %v1333
    %v1335 = vpop.f32.mrf.mxu0
    %v1336 = vadd.f32 %v1119, %v1335
    %1337 = vdwg.mxu0
    %1338 = vmatprep.subr.mxu0 0.0
    %1339 = vmatpush1.msra.mxu0 0.0
    %1340 = vmatprep.subr.mxu0 0.0
    %1341 = vmatpush1.msra.mxu0 0.0
    %1342 = vmatprep.subr.mxu0 0.0
    %1343 = vmatpush1.msra.mxu0 0.0
    %1344 = vmatprep.subr.mxu0 0.0
    %1345 = vmatpush1.msra.mxu0 0.0
    %1346 = vmatprep.subr.mxu0 0.0
    %1347 = vmatpush1.msra.mxu0 0.0
    %1348 = vmatprep.subr.mxu0 0.0
    %1349 = vmatpush1.msra.mxu0 0.0
    %1350 = vmatprep.subr.mxu0 0.0
    %1351 = vmatpush1.msra.mxu0 0.0
    %1352 = vmatprep.subr.mxu0 0.0
    %1353 = vmatpush1.msra.mxu0 0.0
    %1354 = vmatprep.subr.mxu0 %v1107
    %1355 = vmatpush1.msra.mxu0 %v1106
    %1356 = vmatprep.subr.mxu0 %v1091
    %1357 = vmatpush1.msra.mxu0 %v1090
    %1358 = vmatprep.subr.mxu0 %v1075
    %1359 = vmatpush1.msra.mxu0 %v1074
    %1360 = vmatprep.subr.mxu0 %v1059
    %1361 = vmatpush1.msra.mxu0 %v1058
    %1362 = vmatprep.subr.mxu0 %v1043
    %1363 = vmatpush1.msra.mxu0 %v1042
    %1364 = vmatprep.subr.mxu0 %v1027
    %1365 = vmatpush1.msra.mxu0 %v1026
    %1366 = vmatprep.subr.mxu0 %v1011
    %1367 = vmatpush1.msra.mxu0 %v1010
    %1368 = vmatprep.subr.mxu0 %v995
    %1369 = vmatpush1.msra.mxu0 %v994
    %1370 = vmatprep.subr.mxu0 0.0
    %1371 = vmatpush2.msra.mxu0 0.0
    %1372 = vmatprep.subr.mxu0 0.0
    %1373 = vmatpush2.msra.mxu0 0.0
    %1374 = vmatprep.subr.mxu0 0.0
    %1375 = vmatpush2.msra.mxu0 0.0
    %1376 = vmatprep.subr.mxu0 0.0
    %1377 = vmatpush2.msra.mxu0 0.0
    %1378 = vmatprep.subr.mxu0 0.0
    %1379 = vmatpush2.msra.mxu0 0.0
    %1380 = vmatprep.subr.mxu0 0.0
    %1381 = vmatpush2.msra.mxu0 0.0
    %1382 = vmatprep.subr.mxu0 0.0
    %1383 = vmatpush2.msra.mxu0 0.0
    %1384 = vmatprep.subr.mxu0 0.0
    %1385 = vmatpush2.msra.mxu0 0.0
    %1386 = vmatprep.subr.mxu0 0.0
    %1387 = vmatpush2.msra.mxu0 0.0
    %1388 = vmatprep.subr.mxu0 0.0
    %1389 = vmatpush2.msra.mxu0 0.0
    %1390 = vmatprep.subr.mxu0 0.0
    %1391 = vmatpush2.msra.mxu0 0.0
    %1392 = vmatprep.subr.mxu0 0.0
    %1393 = vmatpush2.msra.mxu0 0.0
    %1394 = vmatprep.subr.mxu0 0.0
    %1395 = vmatpush2.msra.mxu0 0.0
    %1396 = vmatprep.subr.mxu0 0.0
    %1397 = vmatpush2.msra.mxu0 0.0
    %1398 = vmatprep.subr.mxu0 0.0
    %1399 = vmatpush2.msra.mxu0 0.0
    %1400 = vmatprep.subr.mxu0 0.0
    %1401 = vmatpush2.msra.mxu0 0.0
    %1402 = vmatprep.mubr.f32.mxu0 0.0
    %1403 = vmatmul.mubr.f32.gmra.mxu0 %v1123
    %v1404 = vpop.f32.mrf.mxu0
    %v1405 = vadd.f32 %v1119, %v1404
    %v1406 = vpop.f32.mrf.mxu0
    %v1407 = vadd.f32 %v1119, %v1406
    %1408 = vdwg.mxu0
    %1409 = vmatprep.subr.mxu0 0.0
    %1410 = vmatpush1.msra.mxu0 0.0
    %1411 = vmatprep.subr.mxu0 0.0
    %1412 = vmatpush1.msra.mxu0 0.0
    %1413 = vmatprep.subr.mxu0 0.0
    %1414 = vmatpush1.msra.mxu0 0.0
    %1415 = vmatprep.subr.mxu0 0.0
    %1416 = vmatpush1.msra.mxu0 0.0
    %1417 = vmatprep.subr.mxu0 0.0
    %1418 = vmatpush1.msra.mxu0 0.0
    %1419 = vmatprep.subr.mxu0 0.0
    %1420 = vmatpush1.msra.mxu0 0.0
    %1421 = vmatprep.subr.mxu0 0.0
    %1422 = vmatpush1.msra.mxu0 0.0
    %1423 = vmatprep.subr.mxu0 0.0
    %1424 = vmatpush1.msra.mxu0 0.0
    %1425 = vmatprep.subr.mxu0 %v1109
    %1426 = vmatpush1.msra.mxu0 %v1108
    %1427 = vmatprep.subr.mxu0 %v1093
    %1428 = vmatpush1.msra.mxu0 %v1092
    %1429 = vmatprep.subr.mxu0 %v1077
    %1430 = vmatpush1.msra.mxu0 %v1076
    %1431 = vmatprep.subr.mxu0 %v1061
    %1432 = vmatpush1.msra.mxu0 %v1060
    %1433 = vmatprep.subr.mxu0 %v1045
    %1434 = vmatpush1.msra.mxu0 %v1044
    %1435 = vmatprep.subr.mxu0 %v1029
    %1436 = vmatpush1.msra.mxu0 %v1028
    %1437 = vmatprep.subr.mxu0 %v1013
    %1438 = vmatpush1.msra.mxu0 %v1012
    %1439 = vmatprep.subr.mxu0 %v997
    %1440 = vmatpush1.msra.mxu0 %v996
    %1441 = vmatprep.subr.mxu0 0.0
    %1442 = vmatpush2.msra.mxu0 0.0
    %1443 = vmatprep.subr.mxu0 0.0
    %1444 = vmatpush2.msra.mxu0 0.0
    %1445 = vmatprep.subr.mxu0 0.0
    %1446 = vmatpush2.msra.mxu0 0.0
    %1447 = vmatprep.subr.mxu0 0.0
    %1448 = vmatpush2.msra.mxu0 0.0
    %1449 = vmatprep.subr.mxu0 0.0
    %1450 = vmatpush2.msra.mxu0 0.0
    %1451 = vmatprep.subr.mxu0 0.0
    %1452 = vmatpush2.msra.mxu0 0.0
    %1453 = vmatprep.subr.mxu0 0.0
    %1454 = vmatpush2.msra.mxu0 0.0
    %1455 = vmatprep.subr.mxu0 0.0
    %1456 = vmatpush2.msra.mxu0 0.0
    %1457 = vmatprep.subr.mxu0 0.0
    %1458 = vmatpush2.msra.mxu0 0.0
    %1459 = vmatprep.subr.mxu0 0.0
    %1460 = vmatpush2.msra.mxu0 0.0
    %1461 = vmatprep.subr.mxu0 0.0
    %1462 = vmatpush2.msra.mxu0 0.0
    %1463 = vmatprep.subr.mxu0 0.0
    %1464 = vmatpush2.msra.mxu0 0.0
    %1465 = vmatprep.subr.mxu0 0.0
    %1466 = vmatpush2.msra.mxu0 0.0
    %1467 = vmatprep.subr.mxu0 0.0
    %1468 = vmatpush2.msra.mxu0 0.0
    %1469 = vmatprep.subr.mxu0 0.0
    %1470 = vmatpush2.msra.mxu0 0.0
    %1471 = vmatprep.subr.mxu0 0.0
    %1472 = vmatpush2.msra.mxu0 0.0
    %1473 = vmatprep.mubr.f32.mxu0 0.0
    %1474 = vmatmul.mubr.f32.gmra.mxu0 %v1123
    %v1475 = vpop.f32.mrf.mxu0
    %v1476 = vadd.f32 %v1119, %v1475
    %v1477 = vpop.f32.mrf.mxu0
    %v1478 = vadd.f32 %v1119, %v1477
    %1479 = vdwg.mxu0
    %1480 = vmatprep.subr.mxu0 0.0
    %1481 = vmatpush1.msra.mxu0 0.0
    %1482 = vmatprep.subr.mxu0 0.0
    %1483 = vmatpush1.msra.mxu0 0.0
    %1484 = vmatprep.subr.mxu0 0.0
    %1485 = vmatpush1.msra.mxu0 0.0
    %1486 = vmatprep.subr.mxu0 0.0
    %1487 = vmatpush1.msra.mxu0 0.0
    %1488 = vmatprep.subr.mxu0 0.0
    %1489 = vmatpush1.msra.mxu0 0.0
    %1490 = vmatprep.subr.mxu0 0.0
    %1491 = vmatpush1.msra.mxu0 0.0
    %1492 = vmatprep.subr.mxu0 0.0
    %1493 = vmatpush1.msra.mxu0 0.0
    %1494 = vmatprep.subr.mxu0 0.0
    %1495 = vmatpush1.msra.mxu0 0.0
    %1496 = vmatprep.subr.mxu0 %v1111
    %1497 = vmatpush1.msra.mxu0 %v1110
    %1498 = vmatprep.subr.mxu0 %v1095
    %1499 = vmatpush1.msra.mxu0 %v1094
    %1500 = vmatprep.subr.mxu0 %v1079
    %1501 = vmatpush1.msra.mxu0 %v1078
    %1502 = vmatprep.subr.mxu0 %v1063
    %1503 = vmatpush1.msra.mxu0 %v1062
    %1504 = vmatprep.subr.mxu0 %v1047
    %1505 = vmatpush1.msra.mxu0 %v1046
    %1506 = vmatprep.subr.mxu0 %v1031
    %1507 = vmatpush1.msra.mxu0 %v1030
    %1508 = vmatprep.subr.mxu0 %v1015
    %1509 = vmatpush1.msra.mxu0 %v1014
    %1510 = vmatprep.subr.mxu0 %v999
    %1511 = vmatpush1.msra.mxu0 %v998
    %1512 = vmatprep.subr.mxu0 0.0
    %1513 = vmatpush2.msra.mxu0 0.0
    %1514 = vmatprep.subr.mxu0 0.0
    %1515 = vmatpush2.msra.mxu0 0.0
    %1516 = vmatprep.subr.mxu0 0.0
    %1517 = vmatpush2.msra.mxu0 0.0
    %1518 = vmatprep.subr.mxu0 0.0
    %1519 = vmatpush2.msra.mxu0 0.0
    %1520 = vmatprep.subr.mxu0 0.0
    %1521 = vmatpush2.msra.mxu0 0.0
    %1522 = vmatprep.subr.mxu0 0.0
    %1523 = vmatpush2.msra.mxu0 0.0
    %1524 = vmatprep.subr.mxu0 0.0
    %1525 = vmatpush2.msra.mxu0 0.0
    %1526 = vmatprep.subr.mxu0 0.0
    %1527 = vmatpush2.msra.mxu0 0.0
    %1528 = vmatprep.subr.mxu0 0.0
    %1529 = vmatpush2.msra.mxu0 0.0
    %1530 = vmatprep.subr.mxu0 0.0
    %1531 = vmatpush2.msra.mxu0 0.0
    %1532 = vmatprep.subr.mxu0 0.0
    %1533 = vmatpush2.msra.mxu0 0.0
    %1534 = vmatprep.subr.mxu0 0.0
    %1535 = vmatpush2.msra.mxu0 0.0
    %1536 = vmatprep.subr.mxu0 0.0
    %1537 = vmatpush2.msra.mxu0 0.0
    %1538 = vmatprep.subr.mxu0 0.0
    %1539 = vmatpush2.msra.mxu0 0.0
    %1540 = vmatprep.subr.mxu0 0.0
    %1541 = vmatpush2.msra.mxu0 0.0
    %1542 = vmatprep.subr.mxu0 0.0
    %1543 = vmatpush2.msra.mxu0 0.0
    %1544 = vmatprep.mubr.f32.mxu0 0.0
    %1545 = vmatmul.mubr.f32.gmra.mxu0 %v1123
    %v1546 = vpop.f32.mrf.mxu0
    %v1547 = vadd.f32 %v1119, %v1546
    %v1548 = vpop.f32.mrf.mxu0
    %v1549 = vadd.f32 %v1119, %v1548
    %1550 = vdwg.mxu0
    %1551 = vmatprep.subr.mxu0 0.0
    %1552 = vmatpush1.msra.mxu0 0.0
    %1553 = vmatprep.subr.mxu0 0.0
    %1554 = vmatpush1.msra.mxu0 0.0
    %1555 = vmatprep.subr.mxu0 0.0
    %1556 = vmatpush1.msra.mxu0 0.0
    %1557 = vmatprep.subr.mxu0 0.0
    %1558 = vmatpush1.msra.mxu0 0.0
    %1559 = vmatprep.subr.mxu0 0.0
    %1560 = vmatpush1.msra.mxu0 0.0
    %1561 = vmatprep.subr.mxu0 0.0
    %1562 = vmatpush1.msra.mxu0 0.0
    %1563 = vmatprep.subr.mxu0 0.0
    %1564 = vmatpush1.msra.mxu0 0.0
    %1565 = vmatprep.subr.mxu0 0.0
    %1566 = vmatpush1.msra.mxu0 0.0
    %1567 = vmatprep.subr.mxu0 %v1113
    %1568 = vmatpush1.msra.mxu0 %v1112
    %1569 = vmatprep.subr.mxu0 %v1097
    %1570 = vmatpush1.msra.mxu0 %v1096
    %1571 = vmatprep.subr.mxu0 %v1081
    %1572 = vmatpush1.msra.mxu0 %v1080
    %1573 = vmatprep.subr.mxu0 %v1065
    %1574 = vmatpush1.msra.mxu0 %v1064
    %1575 = vmatprep.subr.mxu0 %v1049
    %1576 = vmatpush1.msra.mxu0 %v1048
    %1577 = vmatprep.subr.mxu0 %v1033
    %1578 = vmatpush1.msra.mxu0 %v1032
    %1579 = vmatprep.subr.mxu0 %v1017
    %1580 = vmatpush1.msra.mxu0 %v1016
    %1581 = vmatprep.subr.mxu0 %v1001
    %1582 = vmatpush1.msra.mxu0 %v1000
    %1583 = vmatprep.subr.mxu0 0.0
    %1584 = vmatpush2.msra.mxu0 0.0
    %1585 = vmatprep.subr.mxu0 0.0
    %1586 = vmatpush2.msra.mxu0 0.0
    %1587 = vmatprep.subr.mxu0 0.0
    %1588 = vmatpush2.msra.mxu0 0.0
    %1589 = vmatprep.subr.mxu0 0.0
    %1590 = vmatpush2.msra.mxu0 0.0
    %1591 = vmatprep.subr.mxu0 0.0
    %1592 = vmatpush2.msra.mxu0 0.0
    %1593 = vmatprep.subr.mxu0 0.0
    %1594 = vmatpush2.msra.mxu0 0.0
    %1595 = vmatprep.subr.mxu0 0.0
    %1596 = vmatpush2.msra.mxu0 0.0
    %1597 = vmatprep.subr.mxu0 0.0
    %1598 = vmatpush2.msra.mxu0 0.0
    %1599 = vmatprep.subr.mxu0 0.0
    %1600 = vmatpush2.msra.mxu0 0.0
    %1601 = vmatprep.subr.mxu0 0.0
    %1602 = vmatpush2.msra.mxu0 0.0
    %1603 = vmatprep.subr.mxu0 0.0
    %1604 = vmatpush2.msra.mxu0 0.0
    %1605 = vmatprep.subr.mxu0 0.0
    %1606 = vmatpush2.msra.mxu0 0.0
    %1607 = vmatprep.subr.mxu0 0.0
    %1608 = vmatpush2.msra.mxu0 0.0
    %1609 = vmatprep.subr.mxu0 0.0
    %1610 = vmatpush2.msra.mxu0 0.0
    %1611 = vmatprep.subr.mxu0 0.0
    %1612 = vmatpush2.msra.mxu0 0.0
    %1613 = vmatprep.subr.mxu0 0.0
    %1614 = vmatpush2.msra.mxu0 0.0
    %1615 = vmatprep.mubr.f32.mxu0 0.0
    %1616 = vmatmul.mubr.f32.gmra.mxu0 %v1123
    %v1617 = vpop.f32.mrf.mxu0
    %v1618 = vadd.f32 %v1119, %v1617
    %v1619 = vpop.f32.mrf.mxu0
    %v1620 = vadd.f32 %v1119, %v1619
    %1621 = vdwg.mxu0
    %1622 = vmatprep.subr.mxu0 0.0
    %1623 = vmatpush1.msra.mxu0 0.0
    %1624 = vmatprep.subr.mxu0 0.0
    %1625 = vmatpush1.msra.mxu0 0.0
    %1626 = vmatprep.subr.mxu0 0.0
    %1627 = vmatpush1.msra.mxu0 0.0
    %1628 = vmatprep.subr.mxu0 0.0
    %1629 = vmatpush1.msra.mxu0 0.0
    %1630 = vmatprep.subr.mxu0 0.0
    %1631 = vmatpush1.msra.mxu0 0.0
    %1632 = vmatprep.subr.mxu0 0.0
    %1633 = vmatpush1.msra.mxu0 0.0
    %1634 = vmatprep.subr.mxu0 0.0
    %1635 = vmatpush1.msra.mxu0 0.0
    %1636 = vmatprep.subr.mxu0 0.0
    %1637 = vmatpush1.msra.mxu0 0.0
    %1638 = vmatprep.subr.mxu0 %v1115
    %1639 = vmatpush1.msra.mxu0 %v1114
    %1640 = vmatprep.subr.mxu0 %v1099
    %1641 = vmatpush1.msra.mxu0 %v1098
    %1642 = vmatprep.subr.mxu0 %v1083
    %1643 = vmatpush1.msra.mxu0 %v1082
    %1644 = vmatprep.subr.mxu0 %v1067
    %1645 = vmatpush1.msra.mxu0 %v1066
    %1646 = vmatprep.subr.mxu0 %v1051
    %1647 = vmatpush1.msra.mxu0 %v1050
    %1648 = vmatprep.subr.mxu0 %v1035
    %1649 = vmatpush1.msra.mxu0 %v1034
    %1650 = vmatprep.subr.mxu0 %v1019
    %1651 = vmatpush1.msra.mxu0 %v1018
    %1652 = vmatprep.subr.mxu0 %v1003
    %1653 = vmatpush1.msra.mxu0 %v1002
    %1654 = vmatprep.subr.mxu0 0.0
    %1655 = vmatpush2.msra.mxu0 0.0
    %1656 = vmatprep.subr.mxu0 0.0
    %1657 = vmatpush2.msra.mxu0 0.0
    %1658 = vmatprep.subr.mxu0 0.0
    %1659 = vmatpush2.msra.mxu0 0.0
    %1660 = vmatprep.subr.mxu0 0.0
    %1661 = vmatpush2.msra.mxu0 0.0
    %1662 = vmatprep.subr.mxu0 0.0
    %1663 = vmatpush2.msra.mxu0 0.0
    %1664 = vmatprep.subr.mxu0 0.0
    %1665 = vmatpush2.msra.mxu0 0.0
    %1666 = vmatprep.subr.mxu0 0.0
    %1667 = vmatpush2.msra.mxu0 0.0
    %1668 = vmatprep.subr.mxu0 0.0
    %1669 = vmatpush2.msra.mxu0 0.0
    %1670 = vmatprep.subr.mxu0 0.0
    %1671 = vmatpush2.msra.mxu0 0.0
    %1672 = vmatprep.subr.mxu0 0.0
    %1673 = vmatpush2.msra.mxu0 0.0
    %1674 = vmatprep.subr.mxu0 0.0
    %1675 = vmatpush2.msra.mxu0 0.0
    %1676 = vmatprep.subr.mxu0 0.0
    %1677 = vmatpush2.msra.mxu0 0.0
    %1678 = vmatprep.subr.mxu0 0.0
    %1679 = vmatpush2.msra.mxu0 0.0
    %1680 = vmatprep.subr.mxu0 0.0
    %1681 = vmatpush2.msra.mxu0 0.0
    %1682 = vmatprep.subr.mxu0 0.0
    %1683 = vmatpush2.msra.mxu0 0.0
    %1684 = vmatprep.subr.mxu0 0.0
    %1685 = vmatpush2.msra.mxu0 0.0
    %1686 = vmatprep.mubr.f32.mxu0 0.0
    %1687 = vmatmul.mubr.f32.gmra.mxu0 %v1123
    %v1688 = vpop.f32.mrf.mxu0
    %v1689 = vadd.f32 %v1119, %v1688
    %v1690 = vpop.f32.mrf.mxu0
    %v1691 = vadd.f32 %v1119, %v1690
    %1692 = vdwg.mxu0
    %v1693 = vmax.f32 %v1192, 0.0
    %v1694 = vmax.f32 %v1194, 0.0
    %v1695 = vmax.f32 %v1263, 0.0
    %v1696 = vmax.f32 %v1265, 0.0
    %v1697 = vmax.f32 %v1334, 0.0
    %v1698 = vmax.f32 %v1336, 0.0
    %v1699 = vmax.f32 %v1405, 0.0
    %v1700 = vmax.f32 %v1407, 0.0
    %v1701 = vmax.f32 %v1476, 0.0
    %v1702 = vmax.f32 %v1478, 0.0
    %v1703 = vmax.f32 %v1547, 0.0
    %v1704 = vmax.f32 %v1549, 0.0
    %v1705 = vmax.f32 %v1618, 0.0
    %v1706 = vmax.f32 %v1620, 0.0
    %v1707 = vmax.f32 %v1689, 0.0
    %v1708 = vmax.f32 %v1691, 0.0
    %v1709 = vadd.f32 %v1693, %v1694
    %v1710 = vadd.f32 %v1709, %v1695
    %v1711 = vadd.f32 %v1710, %v1696
    %v1712 = vadd.f32 %v1711, %v1697
    %v1713 = vadd.f32 %v1712, %v1698
    %v1714 = vadd.f32 %v1713, %v1699
    %v1715 = vadd.f32 %v1714, %v1700
    %v1716 = vadd.f32 %v1715, %v1701
    %v1717 = vadd.f32 %v1716, %v1702
    %v1718 = vadd.f32 %v1717, %v1703
    %v1719 = vadd.f32 %v1718, %v1704
    %v1720 = vadd.f32 %v1719, %v1705
    %v1721 = vadd.f32 %v1720, %v1706
    %v1722 = vadd.f32 %v1721, %v1707
    %v1723 = vadd.f32 %v1722, %v1708
    %v1724 = vld [vmem:[%s3] sm:$0xff]
    %v1725 = vld [vmem:[%s4] sm:$0xff]
    %v1742 = vcombine.high %v1693, %v1694
    %v1743 = vcombine.high %v1695, %v1696
    %v1744 = vcombine.high %v1697, %v1698
    %v1745 = vcombine.high %v1699, %v1700
    %v1747 = vunpack.c.l.s4 1966171168
    %v1748 = vunpack.c.0.s8 %v1747
    %v1749 = vlaneseq
    %v1750 = vshrl.u32 %v1749, 7
    %v1751 = vsub.s32 %v1748, %v1750
    %v1752 = vrot.slane %v1742, %v1751
    %v1754 = vunpack.c.l.s4 1966171168
    %v1755 = vunpack.c.0.s8 %v1754
    %v1756 = vlaneseq
    %v1757 = vshrl.u32 %v1756, 7
    %v1758 = vsub.s32 %v1755, %v1757
    %v1759 = vrot.slane %v1743, %v1758
    %v1761 = vunpack.c.l.s4 1966171168
    %v1762 = vunpack.c.0.s8 %v1761
    %v1763 = vlaneseq
    %v1764 = vshrl.u32 %v1763, 7
    %v1765 = vsub.s32 %v1762, %v1764
    %v1766 = vrot.slane %v1744, %v1765
    %v1768 = vunpack.c.l.s4 1966171168
    %v1769 = vunpack.c.0.s8 %v1768
    %v1770 = vlaneseq
    %v1771 = vshrl.u32 %v1770, 7
    %v1772 = vsub.s32 %v1769, %v1771
    %v1773 = vrot.slane %v1745, %v1772
    %v1774 = vcombine.low %v1752, %v1759
    %v1775 = vcombine.high %v1752, %v1759
    %v1776 = vcombine.low %v1766, %v1773
    %v1777 = vcombine.high %v1766, %v1773
    %v1779 = vunpack.c.l.s4 1966171168
    %v1780 = vunpack.c.0.s8 %v1779
    %v1781 = vlaneseq
    %v1782 = vshrl.u32 %v1781, 7
    %v1783 = vsub.s32 %v1780, %v1782
    %v1784 = vrot.slane %v1774, %v1783
    %v1786 = vunpack.c.l.s4 1966171168
    %v1787 = vunpack.c.0.s8 %v1786
    %v1788 = vlaneseq
    %v1789 = vshrl.u32 %v1788, 7
    %v1790 = vsub.s32 %v1787, %v1789
    %v1791 = vrot.slane %v1775, %v1790
    %v1793 = vunpack.c.l.s4 1966171168
    %v1794 = vunpack.c.0.s8 %v1793
    %v1795 = vlaneseq
    %v1796 = vshrl.u32 %v1795, 7
    %v1797 = vsub.s32 %v1794, %v1796
    %v1798 = vrot.slane %v1776, %v1797
    %v1800 = vunpack.c.l.s4 1966171168
    %v1801 = vunpack.c.0.s8 %v1800
    %v1802 = vlaneseq
    %v1803 = vshrl.u32 %v1802, 7
    %v1804 = vsub.s32 %v1801, %v1803
    %v1805 = vrot.slane %v1777, %v1804
    %v1806 = vcombine.low %v1784, %v1798
    %v1807 = vcombine.high %v1784, %v1798
    %v1808 = vcombine.low %v1791, %v1805
    %v1809 = vcombine.high %v1791, %v1805
    %v1810 = vcombine.high %v1701, %v1702
    %v1811 = vcombine.high %v1703, %v1704
    %v1812 = vcombine.high %v1705, %v1706
    %v1813 = vcombine.high %v1707, %v1708
    %v1815 = vunpack.c.l.s4 1966171168
    %v1816 = vunpack.c.0.s8 %v1815
    %v1817 = vlaneseq
    %v1818 = vshrl.u32 %v1817, 7
    %v1819 = vsub.s32 %v1816, %v1818
    %v1820 = vrot.slane %v1810, %v1819
    %v1822 = vunpack.c.l.s4 1966171168
    %v1823 = vunpack.c.0.s8 %v1822
    %v1824 = vlaneseq
    %v1825 = vshrl.u32 %v1824, 7
    %v1826 = vsub.s32 %v1823, %v1825
    %v1827 = vrot.slane %v1811, %v1826
    %v1829 = vunpack.c.l.s4 1966171168
    %v1830 = vunpack.c.0.s8 %v1829
    %v1831 = vlaneseq
    %v1832 = vshrl.u32 %v1831, 7
    %v1833 = vsub.s32 %v1830, %v1832
    %v1834 = vrot.slane %v1812, %v1833
    %v1836 = vunpack.c.l.s4 1966171168
    %v1837 = vunpack.c.0.s8 %v1836
    %v1838 = vlaneseq
    %v1839 = vshrl.u32 %v1838, 7
    %v1840 = vsub.s32 %v1837, %v1839
    %v1841 = vrot.slane %v1813, %v1840
    %v1842 = vcombine.low %v1820, %v1827
    %v1843 = vcombine.high %v1820, %v1827
    %v1844 = vcombine.low %v1834, %v1841
    %v1845 = vcombine.high %v1834, %v1841
    %v1847 = vunpack.c.l.s4 1966171168
    %v1848 = vunpack.c.0.s8 %v1847
    %v1849 = vlaneseq
    %v1850 = vshrl.u32 %v1849, 7
    %v1851 = vsub.s32 %v1848, %v1850
    %v1852 = vrot.slane %v1842, %v1851
    %v1854 = vunpack.c.l.s4 1966171168
    %v1855 = vunpack.c.0.s8 %v1854
    %v1856 = vlaneseq
    %v1857 = vshrl.u32 %v1856, 7
    %v1858 = vsub.s32 %v1855, %v1857
    %v1859 = vrot.slane %v1843, %v1858
    %v1861 = vunpack.c.l.s4 1966171168
    %v1862 = vunpack.c.0.s8 %v1861
    %v1863 = vlaneseq
    %v1864 = vshrl.u32 %v1863, 7
    %v1865 = vsub.s32 %v1862, %v1864
    %v1866 = vrot.slane %v1844, %v1865
    %v1868 = vunpack.c.l.s4 1966171168
    %v1869 = vunpack.c.0.s8 %v1868
    %v1870 = vlaneseq
    %v1871 = vshrl.u32 %v1870, 7
    %v1872 = vsub.s32 %v1869, %v1871
    %v1873 = vrot.slane %v1845, %v1872
    %v1874 = vcombine.low %v1852, %v1866
    %v1875 = vcombine.high %v1852, %v1866
    %v1876 = vcombine.low %v1859, %v1873
    %v1877 = vcombine.high %v1859, %v1873
    %v1878 = vlaneseq
    %v1879 = vshrl.u32 %v1878, 7
    %v1880 = vsub.s32 0, %v1879
    %v1881 = vrot.slane %v1806, %v1880
    %v1882 = vlaneseq
    %v1883 = vshrl.u32 %v1882, 7
    %v1884 = vsub.s32 1, %v1883
    %v1885 = vrot.slane %v1806, %v1884
    %v1886 = vlaneseq
    %v1887 = vshrl.u32 %v1886, 7
    %v1888 = vsub.s32 2, %v1887
    %v1889 = vrot.slane %v1806, %v1888
    %v1890 = vlaneseq
    %v1891 = vshrl.u32 %v1890, 7
    %v1892 = vsub.s32 3, %v1891
    %v1893 = vrot.slane %v1806, %v1892
    %v1894 = vlaneseq
    %v1895 = vshrl.u32 %v1894, 7
    %v1896 = vsub.s32 4, %v1895
    %v1897 = vrot.slane %v1806, %v1896
    %v1898 = vlaneseq
    %v1899 = vshrl.u32 %v1898, 7
    %v1900 = vsub.s32 5, %v1899
    %v1901 = vrot.slane %v1806, %v1900
    %v1902 = vlaneseq
    %v1903 = vshrl.u32 %v1902, 7
    %v1904 = vsub.s32 6, %v1903
    %v1905 = vrot.slane %v1806, %v1904
    %v1906 = vlaneseq
    %v1907 = vshrl.u32 %v1906, 7
    %v1908 = vsub.s32 7, %v1907
    %v1909 = vrot.slane %v1806, %v1908
    %v1910 = vlaneseq
    %v1911 = vshrl.u32 %v1910, 7
    %v1912 = vsub.s32 0, %v1911
    %v1913 = vrot.slane %v1874, %v1912
    %v1914 = vlaneseq
    %v1915 = vshrl.u32 %v1914, 7
    %v1916 = vsub.s32 1, %v1915
    %v1917 = vrot.slane %v1874, %v1916
    %v1918 = vlaneseq
    %v1919 = vshrl.u32 %v1918, 7
    %v1920 = vsub.s32 2, %v1919
    %v1921 = vrot.slane %v1874, %v1920
    %v1922 = vlaneseq
    %v1923 = vshrl.u32 %v1922, 7
    %v1924 = vsub.s32 3, %v1923
    %v1925 = vrot.slane %v1874, %v1924
    %v1926 = vlaneseq
    %v1927 = vshrl.u32 %v1926, 7
    %v1928 = vsub.s32 4, %v1927
    %v1929 = vrot.slane %v1874, %v1928
    %v1930 = vlaneseq
    %v1931 = vshrl.u32 %v1930, 7
    %v1932 = vsub.s32 5, %v1931
    %v1933 = vrot.slane %v1874, %v1932
    %v1934 = vlaneseq
    %v1935 = vshrl.u32 %v1934, 7
    %v1936 = vsub.s32 6, %v1935
    %v1937 = vrot.slane %v1874, %v1936
    %v1938 = vlaneseq
    %v1939 = vshrl.u32 %v1938, 7
    %v1940 = vsub.s32 7, %v1939
    %v1941 = vrot.slane %v1874, %v1940
    %v1942 = vlaneseq
    %v1943 = vshrl.u32 %v1942, 7
    %v1944 = vsub.s32 0, %v1943
    %v1945 = vrot.slane %v1808, %v1944
    %v1946 = vlaneseq
    %v1947 = vshrl.u32 %v1946, 7
    %v1948 = vsub.s32 1, %v1947
    %v1949 = vrot.slane %v1808, %v1948
    %v1950 = vlaneseq
    %v1951 = vshrl.u32 %v1950, 7
    %v1952 = vsub.s32 2, %v1951
    %v1953 = vrot.slane %v1808, %v1952
    %v1954 = vlaneseq
    %v1955 = vshrl.u32 %v1954, 7
    %v1956 = vsub.s32 3, %v1955
    %v1957 = vrot.slane %v1808, %v1956
    %v1958 = vlaneseq
    %v1959 = vshrl.u32 %v1958, 7
    %v1960 = vsub.s32 4, %v1959
    %v1961 = vrot.slane %v1808, %v1960
    %v1962 = vlaneseq
    %v1963 = vshrl.u32 %v1962, 7
    %v1964 = vsub.s32 5, %v1963
    %v1965 = vrot.slane %v1808, %v1964
    %v1966 = vlaneseq
    %v1967 = vshrl.u32 %v1966, 7
    %v1968 = vsub.s32 6, %v1967
    %v1969 = vrot.slane %v1808, %v1968
    %v1970 = vlaneseq
    %v1971 = vshrl.u32 %v1970, 7
    %v1972 = vsub.s32 7, %v1971
    %v1973 = vrot.slane %v1808, %v1972
    %v1974 = vlaneseq
    %v1975 = vshrl.u32 %v1974, 7
    %v1976 = vsub.s32 0, %v1975
    %v1977 = vrot.slane %v1876, %v1976
    %v1978 = vlaneseq
    %v1979 = vshrl.u32 %v1978, 7
    %v1980 = vsub.s32 1, %v1979
    %v1981 = vrot.slane %v1876, %v1980
    %v1982 = vlaneseq
    %v1983 = vshrl.u32 %v1982, 7
    %v1984 = vsub.s32 2, %v1983
    %v1985 = vrot.slane %v1876, %v1984
    %v1986 = vlaneseq
    %v1987 = vshrl.u32 %v1986, 7
    %v1988 = vsub.s32 3, %v1987
    %v1989 = vrot.slane %v1876, %v1988
    %v1990 = vlaneseq
    %v1991 = vshrl.u32 %v1990, 7
    %v1992 = vsub.s32 4, %v1991
    %v1993 = vrot.slane %v1876, %v1992
    %v1994 = vlaneseq
    %v1995 = vshrl.u32 %v1994, 7
    %v1996 = vsub.s32 5, %v1995
    %v1997 = vrot.slane %v1876, %v1996
    %v1998 = vlaneseq
    %v1999 = vshrl.u32 %v1998, 7
    %v2000 = vsub.s32 6, %v1999
    %v2001 = vrot.slane %v1876, %v2000
    %v2002 = vlaneseq
    %v2003 = vshrl.u32 %v2002, 7
    %v2004 = vsub.s32 7, %v2003
    %v2005 = vrot.slane %v1876, %v2004
    %v2006 = vlaneseq
    %v2007 = vshrl.u32 %v2006, 7
    %v2008 = vsub.s32 0, %v2007
    %v2009 = vrot.slane %v1807, %v2008
    %v2010 = vlaneseq
    %v2011 = vshrl.u32 %v2010, 7
    %v2012 = vsub.s32 1, %v2011
    %v2013 = vrot.slane %v1807, %v2012
    %v2014 = vlaneseq
    %v2015 = vshrl.u32 %v2014, 7
    %v2016 = vsub.s32 2, %v2015
    %v2017 = vrot.slane %v1807, %v2016
    %v2018 = vlaneseq
    %v2019 = vshrl.u32 %v2018, 7
    %v2020 = vsub.s32 3, %v2019
    %v2021 = vrot.slane %v1807, %v2020
    %v2022 = vlaneseq
    %v2023 = vshrl.u32 %v2022, 7
    %v2024 = vsub.s32 4, %v2023
    %v2025 = vrot.slane %v1807, %v2024
    %v2026 = vlaneseq
    %v2027 = vshrl.u32 %v2026, 7
    %v2028 = vsub.s32 5, %v2027
    %v2029 = vrot.slane %v1807, %v2028
    %v2030 = vlaneseq
    %v2031 = vshrl.u32 %v2030, 7
    %v2032 = vsub.s32 6, %v2031
    %v2033 = vrot.slane %v1807, %v2032
    %v2034 = vlaneseq
    %v2035 = vshrl.u32 %v2034, 7
    %v2036 = vsub.s32 7, %v2035
    %v2037 = vrot.slane %v1807, %v2036
    %v2038 = vlaneseq
    %v2039 = vshrl.u32 %v2038, 7
    %v2040 = vsub.s32 0, %v2039
    %v2041 = vrot.slane %v1875, %v2040
    %v2042 = vlaneseq
    %v2043 = vshrl.u32 %v2042, 7
    %v2044 = vsub.s32 1, %v2043
    %v2045 = vrot.slane %v1875, %v2044
    %v2046 = vlaneseq
    %v2047 = vshrl.u32 %v2046, 7
    %v2048 = vsub.s32 2, %v2047
    %v2049 = vrot.slane %v1875, %v2048
    %v2050 = vlaneseq
    %v2051 = vshrl.u32 %v2050, 7
    %v2052 = vsub.s32 3, %v2051
    %v2053 = vrot.slane %v1875, %v2052
    %v2054 = vlaneseq
    %v2055 = vshrl.u32 %v2054, 7
    %v2056 = vsub.s32 4, %v2055
    %v2057 = vrot.slane %v1875, %v2056
    %v2058 = vlaneseq
    %v2059 = vshrl.u32 %v2058, 7
    %v2060 = vsub.s32 5, %v2059
    %v2061 = vrot.slane %v1875, %v2060
    %v2062 = vlaneseq
    %v2063 = vshrl.u32 %v2062, 7
    %v2064 = vsub.s32 6, %v2063
    %v2065 = vrot.slane %v1875, %v2064
    %v2066 = vlaneseq
    %v2067 = vshrl.u32 %v2066, 7
    %v2068 = vsub.s32 7, %v2067
    %v2069 = vrot.slane %v1875, %v2068
    %v2070 = vlaneseq
    %v2071 = vshrl.u32 %v2070, 7
    %v2072 = vsub.s32 0, %v2071
    %v2073 = vrot.slane %v1809, %v2072
    %v2074 = vlaneseq
    %v2075 = vshrl.u32 %v2074, 7
    %v2076 = vsub.s32 1, %v2075
    %v2077 = vrot.slane %v1809, %v2076
    %v2078 = vlaneseq
    %v2079 = vshrl.u32 %v2078, 7
    %v2080 = vsub.s32 2, %v2079
    %v2081 = vrot.slane %v1809, %v2080
    %v2082 = vlaneseq
    %v2083 = vshrl.u32 %v2082, 7
    %v2084 = vsub.s32 3, %v2083
    %v2085 = vrot.slane %v1809, %v2084
    %v2086 = vlaneseq
    %v2087 = vshrl.u32 %v2086, 7
    %v2088 = vsub.s32 4, %v2087
    %v2089 = vrot.slane %v1809, %v2088
    %v2090 = vlaneseq
    %v2091 = vshrl.u32 %v2090, 7
    %v2092 = vsub.s32 5, %v2091
    %v2093 = vrot.slane %v1809, %v2092
    %v2094 = vlaneseq
    %v2095 = vshrl.u32 %v2094, 7
    %v2096 = vsub.s32 6, %v2095
    %v2097 = vrot.slane %v1809, %v2096
    %v2098 = vlaneseq
    %v2099 = vshrl.u32 %v2098, 7
    %v2100 = vsub.s32 7, %v2099
    %v2101 = vrot.slane %v1809, %v2100
    %v2102 = vlaneseq
    %v2103 = vshrl.u32 %v2102, 7
    %v2104 = vsub.s32 0, %v2103
    %v2105 = vrot.slane %v1877, %v2104
    %v2106 = vlaneseq
    %v2107 = vshrl.u32 %v2106, 7
    %v2108 = vsub.s32 1, %v2107
    %v2109 = vrot.slane %v1877, %v2108
    %v2110 = vlaneseq
    %v2111 = vshrl.u32 %v2110, 7
    %v2112 = vsub.s32 2, %v2111
    %v2113 = vrot.slane %v1877, %v2112
    %v2114 = vlaneseq
    %v2115 = vshrl.u32 %v2114, 7
    %v2116 = vsub.s32 3, %v2115
    %v2117 = vrot.slane %v1877, %v2116
    %v2118 = vlaneseq
    %v2119 = vshrl.u32 %v2118, 7
    %v2120 = vsub.s32 4, %v2119
    %v2121 = vrot.slane %v1877, %v2120
    %v2122 = vlaneseq
    %v2123 = vshrl.u32 %v2122, 7
    %v2124 = vsub.s32 5, %v2123
    %v2125 = vrot.slane %v1877, %v2124
    %v2126 = vlaneseq
    %v2127 = vshrl.u32 %v2126, 7
    %v2128 = vsub.s32 6, %v2127
    %v2129 = vrot.slane %v1877, %v2128
    %v2130 = vlaneseq
    %v2131 = vshrl.u32 %v2130, 7
    %v2132 = vsub.s32 7, %v2131
    %v2133 = vrot.slane %v1877, %v2132
    %v2198 = vmul.f32 %v1881, %v41
    %v2199 = vmul.f32 %v1885, %v42
    %v2200 = vmul.f32 %v1889, %v43
    %v2201 = vmul.f32 %v1893, %v44
    %v2202 = vmul.f32 %v1897, %v45
    %v2203 = vmul.f32 %v1901, %v46
    %v2204 = vmul.f32 %v1905, %v47
    %v2205 = vmul.f32 %v1909, %v48
    %v2206 = vmul.f32 %v1913, %v49
    %v2207 = vmul.f32 %v1917, %v50
    %v2208 = vmul.f32 %v1921, %v51
    %v2209 = vmul.f32 %v1925, %v52
    %v2210 = vmul.f32 %v1929, %v53
    %v2211 = vmul.f32 %v1933, %v54
    %v2212 = vmul.f32 %v1937, %v55
    %v2213 = vmul.f32 %v1941, %v56
    %v2214 = vmul.f32 %v1945, %v41
    %v2215 = vmul.f32 %v1949, %v42
    %v2216 = vmul.f32 %v1953, %v43
    %v2217 = vmul.f32 %v1957, %v44
    %v2218 = vmul.f32 %v1961, %v45
    %v2219 = vmul.f32 %v1965, %v46
    %v2220 = vmul.f32 %v1969, %v47
    %v2221 = vmul.f32 %v1973, %v48
    %v2222 = vmul.f32 %v1977, %v49
    %v2223 = vmul.f32 %v1981, %v50
    %v2224 = vmul.f32 %v1985, %v51
    %v2225 = vmul.f32 %v1989, %v52
    %v2226 = vmul.f32 %v1993, %v53
    %v2227 = vmul.f32 %v1997, %v54
    %v2228 = vmul.f32 %v2001, %v55
    %v2229 = vmul.f32 %v2005, %v56
    %v2230 = vmul.f32 %v2009, %v41
    %v2231 = vmul.f32 %v2013, %v42
    %v2232 = vmul.f32 %v2017, %v43
    %v2233 = vmul.f32 %v2021, %v44
    %v2234 = vmul.f32 %v2025, %v45
    %v2235 = vmul.f32 %v2029, %v46
    %v2236 = vmul.f32 %v2033, %v47
    %v2237 = vmul.f32 %v2037, %v48
    %v2238 = vmul.f32 %v2041, %v49
    %v2239 = vmul.f32 %v2045, %v50
    %v2240 = vmul.f32 %v2049, %v51
    %v2241 = vmul.f32 %v2053, %v52
    %v2242 = vmul.f32 %v2057, %v53
    %v2243 = vmul.f32 %v2061, %v54
    %v2244 = vmul.f32 %v2065, %v55
    %v2245 = vmul.f32 %v2069, %v56
    %v2246 = vmul.f32 %v2073, %v41
    %v2247 = vmul.f32 %v2077, %v42
    %v2248 = vmul.f32 %v2081, %v43
    %v2249 = vmul.f32 %v2085, %v44
    %v2250 = vmul.f32 %v2089, %v45
    %v2251 = vmul.f32 %v2093, %v46
    %v2252 = vmul.f32 %v2097, %v47
    %v2253 = vmul.f32 %v2101, %v48
    %v2254 = vmul.f32 %v2105, %v49
    %v2255 = vmul.f32 %v2109, %v50
    %v2256 = vmul.f32 %v2113, %v51
    %v2257 = vmul.f32 %v2117, %v52
    %v2258 = vmul.f32 %v2121, %v53
    %v2259 = vmul.f32 %v2125, %v54
    %v2260 = vmul.f32 %v2129, %v55
    %v2261 = vmul.f32 %v2133, %v56
    %2263 = vset.pattern.permute.xlu0 0
    %2264 = vperm.xlu0 %2263, %v1725
    %v2265 = vpop.permute.xlu0 %2264
    %vm2267 = vcmask 261120
    %v2269 = vsel %vm2267, %v1724, 0
    %2271 = vmatprep.subr.mxu0 0.0
    %2272 = vmatpush1.msra.mxu0 0.0
    %2273 = vmatprep.subr.mxu0 0.0
    %2274 = vmatpush1.msra.mxu0 0.0
    %2275 = vmatprep.subr.mxu0 0.0
    %2276 = vmatpush1.msra.mxu0 0.0
    %2277 = vmatprep.subr.mxu0 0.0
    %2278 = vmatpush1.msra.mxu0 0.0
    %2279 = vmatprep.subr.mxu0 0.0
    %2280 = vmatpush1.msra.mxu0 0.0
    %2281 = vmatprep.subr.mxu0 0.0
    %2282 = vmatpush1.msra.mxu0 0.0
    %2283 = vmatprep.subr.mxu0 0.0
    %2284 = vmatpush1.msra.mxu0 0.0
    %2285 = vmatprep.subr.mxu0 0.0
    %2286 = vmatpush1.msra.mxu0 0.0
    %2287 = vmatprep.subr.mxu0 0.0
    %2288 = vmatpush1.msra.mxu0 0.0
    %2289 = vmatprep.subr.mxu0 0.0
    %2290 = vmatpush1.msra.mxu0 0.0
    %2291 = vmatprep.subr.mxu0 0.0
    %2292 = vmatpush1.msra.mxu0 0.0
    %2293 = vmatprep.subr.mxu0 0.0
    %2294 = vmatpush1.msra.mxu0 0.0
    %2295 = vmatprep.subr.mxu0 %v2247
    %2296 = vmatpush1.msra.mxu0 %v2246
    %2297 = vmatprep.subr.mxu0 %v2231
    %2298 = vmatpush1.msra.mxu0 %v2230
    %2299 = vmatprep.subr.mxu0 %v2215
    %2300 = vmatpush1.msra.mxu0 %v2214
    %2301 = vmatprep.subr.mxu0 %v2199
    %2302 = vmatpush1.msra.mxu0 %v2198
    %2303 = vmatprep.subr.mxu0 0.0
    %2304 = vmatpush2.msra.mxu0 0.0
    %2305 = vmatprep.subr.mxu0 0.0
    %2306 = vmatpush2.msra.mxu0 0.0
    %2307 = vmatprep.subr.mxu0 0.0
    %2308 = vmatpush2.msra.mxu0 0.0
    %2309 = vmatprep.subr.mxu0 0.0
    %2310 = vmatpush2.msra.mxu0 0.0
    %2311 = vmatprep.subr.mxu0 0.0
    %2312 = vmatpush2.msra.mxu0 0.0
    %2313 = vmatprep.subr.mxu0 0.0
    %2314 = vmatpush2.msra.mxu0 0.0
    %2315 = vmatprep.subr.mxu0 0.0
    %2316 = vmatpush2.msra.mxu0 0.0
    %2317 = vmatprep.subr.mxu0 0.0
    %2318 = vmatpush2.msra.mxu0 0.0
    %2319 = vmatprep.subr.mxu0 0.0
    %2320 = vmatpush2.msra.mxu0 0.0
    %2321 = vmatprep.subr.mxu0 0.0
    %2322 = vmatpush2.msra.mxu0 0.0
    %2323 = vmatprep.subr.mxu0 0.0
    %2324 = vmatpush2.msra.mxu0 0.0
    %2325 = vmatprep.subr.mxu0 0.0
    %2326 = vmatpush2.msra.mxu0 0.0
    %2327 = vmatprep.subr.mxu0 0.0
    %2328 = vmatpush2.msra.mxu0 0.0
    %2329 = vmatprep.subr.mxu0 0.0
    %2330 = vmatpush2.msra.mxu0 0.0
    %2331 = vmatprep.subr.mxu0 0.0
    %2332 = vmatpush2.msra.mxu0 0.0
    %2333 = vmatprep.subr.mxu0 0.0
    %2334 = vmatpush2.msra.mxu0 0.0
    %2335 = vmatprep.mubr.f32.mxu0 0.0
    %2336 = vmatmul.mubr.f32.gmra.mxu0 %v2269
    %v2337 = vpop.f32.mrf.mxu0
    %v2338 = vadd.f32 %v2265, %v2337
    %v2339 = vpop.f32.mrf.mxu0
    %v2340 = vadd.f32 %v2265, %v2339
    %2341 = vdwg.mxu0
    %2342 = vmatprep.subr.mxu0 0.0
    %2343 = vmatpush1.msra.mxu0 0.0
    %2344 = vmatprep.subr.mxu0 0.0
    %2345 = vmatpush1.msra.mxu0 0.0
    %2346 = vmatprep.subr.mxu0 0.0
    %2347 = vmatpush1.msra.mxu0 0.0
    %2348 = vmatprep.subr.mxu0 0.0
    %2349 = vmatpush1.msra.mxu0 0.0
    %2350 = vmatprep.subr.mxu0 0.0
    %2351 = vmatpush1.msra.mxu0 0.0
    %2352 = vmatprep.subr.mxu0 0.0
    %2353 = vmatpush1.msra.mxu0 0.0
    %2354 = vmatprep.subr.mxu0 0.0
    %2355 = vmatpush1.msra.mxu0 0.0
    %2356 = vmatprep.subr.mxu0 0.0
    %2357 = vmatpush1.msra.mxu0 0.0
    %2358 = vmatprep.subr.mxu0 0.0
    %2359 = vmatpush1.msra.mxu0 0.0
    %2360 = vmatprep.subr.mxu0 0.0
    %2361 = vmatpush1.msra.mxu0 0.0
    %2362 = vmatprep.subr.mxu0 0.0
    %2363 = vmatpush1.msra.mxu0 0.0
    %2364 = vmatprep.subr.mxu0 0.0
    %2365 = vmatpush1.msra.mxu0 0.0
    %2366 = vmatprep.subr.mxu0 %v2249
    %2367 = vmatpush1.msra.mxu0 %v2248
    %2368 = vmatprep.subr.mxu0 %v2233
    %2369 = vmatpush1.msra.mxu0 %v2232
    %2370 = vmatprep.subr.mxu0 %v2217
    %2371 = vmatpush1.msra.mxu0 %v2216
    %2372 = vmatprep.subr.mxu0 %v2201
    %2373 = vmatpush1.msra.mxu0 %v2200
    %2374 = vmatprep.subr.mxu0 0.0
    %2375 = vmatpush2.msra.mxu0 0.0
    %2376 = vmatprep.subr.mxu0 0.0
    %2377 = vmatpush2.msra.mxu0 0.0
    %2378 = vmatprep.subr.mxu0 0.0
    %2379 = vmatpush2.msra.mxu0 0.0
    %2380 = vmatprep.subr.mxu0 0.0
    %2381 = vmatpush2.msra.mxu0 0.0
    %2382 = vmatprep.subr.mxu0 0.0
    %2383 = vmatpush2.msra.mxu0 0.0
    %2384 = vmatprep.subr.mxu0 0.0
    %2385 = vmatpush2.msra.mxu0 0.0
    %2386 = vmatprep.subr.mxu0 0.0
    %2387 = vmatpush2.msra.mxu0 0.0
    %2388 = vmatprep.subr.mxu0 0.0
    %2389 = vmatpush2.msra.mxu0 0.0
    %2390 = vmatprep.subr.mxu0 0.0
    %2391 = vmatpush2.msra.mxu0 0.0
    %2392 = vmatprep.subr.mxu0 0.0
    %2393 = vmatpush2.msra.mxu0 0.0
    %2394 = vmatprep.subr.mxu0 0.0
    %2395 = vmatpush2.msra.mxu0 0.0
    %2396 = vmatprep.subr.mxu0 0.0
    %2397 = vmatpush2.msra.mxu0 0.0
    %2398 = vmatprep.subr.mxu0 0.0
    %2399 = vmatpush2.msra.mxu0 0.0
    %2400 = vmatprep.subr.mxu0 0.0
    %2401 = vmatpush2.msra.mxu0 0.0
    %2402 = vmatprep.subr.mxu0 0.0
    %2403 = vmatpush2.msra.mxu0 0.0
    %2404 = vmatprep.subr.mxu0 0.0
    %2405 = vmatpush2.msra.mxu0 0.0
    %2406 = vmatprep.mubr.f32.mxu0 0.0
    %2407 = vmatmul.mubr.f32.gmra.mxu0 %v2269
    %v2408 = vpop.f32.mrf.mxu0
    %v2409 = vadd.f32 %v2265, %v2408
    %v2410 = vpop.f32.mrf.mxu0
    %v2411 = vadd.f32 %v2265, %v2410
    %2412 = vdwg.mxu0
    %2413 = vmatprep.subr.mxu0 0.0
    %2414 = vmatpush1.msra.mxu0 0.0
    %2415 = vmatprep.subr.mxu0 0.0
    %2416 = vmatpush1.msra.mxu0 0.0
    %2417 = vmatprep.subr.mxu0 0.0
    %2418 = vmatpush1.msra.mxu0 0.0
    %2419 = vmatprep.subr.mxu0 0.0
    %2420 = vmatpush1.msra.mxu0 0.0
    %2421 = vmatprep.subr.mxu0 0.0
    %2422 = vmatpush1.msra.mxu0 0.0
    %2423 = vmatprep.subr.mxu0 0.0
    %2424 = vmatpush1.msra.mxu0 0.0
    %2425 = vmatprep.subr.mxu0 0.0
    %2426 = vmatpush1.msra.mxu0 0.0
    %2427 = vmatprep.subr.mxu0 0.0
    %2428 = vmatpush1.msra.mxu0 0.0
    %2429 = vmatprep.subr.mxu0 0.0
    %2430 = vmatpush1.msra.mxu0 0.0
    %2431 = vmatprep.subr.mxu0 0.0
    %2432 = vmatpush1.msra.mxu0 0.0
    %2433 = vmatprep.subr.mxu0 0.0
    %2434 = vmatpush1.msra.mxu0 0.0
    %2435 = vmatprep.subr.mxu0 0.0
    %2436 = vmatpush1.msra.mxu0 0.0
    %2437 = vmatprep.subr.mxu0 %v2251
    %2438 = vmatpush1.msra.mxu0 %v2250
    %2439 = vmatprep.subr.mxu0 %v2235
    %2440 = vmatpush1.msra.mxu0 %v2234
    %2441 = vmatprep.subr.mxu0 %v2219
    %2442 = vmatpush1.msra.mxu0 %v2218
    %2443 = vmatprep.subr.mxu0 %v2203
    %2444 = vmatpush1.msra.mxu0 %v2202
    %2445 = vmatprep.subr.mxu0 0.0
    %2446 = vmatpush2.msra.mxu0 0.0
    %2447 = vmatprep.subr.mxu0 0.0
    %2448 = vmatpush2.msra.mxu0 0.0
    %2449 = vmatprep.subr.mxu0 0.0
    %2450 = vmatpush2.msra.mxu0 0.0
    %2451 = vmatprep.subr.mxu0 0.0
    %2452 = vmatpush2.msra.mxu0 0.0
    %2453 = vmatprep.subr.mxu0 0.0
    %2454 = vmatpush2.msra.mxu0 0.0
    %2455 = vmatprep.subr.mxu0 0.0
    %2456 = vmatpush2.msra.mxu0 0.0
    %2457 = vmatprep.subr.mxu0 0.0
    %2458 = vmatpush2.msra.mxu0 0.0
    %2459 = vmatprep.subr.mxu0 0.0
    %2460 = vmatpush2.msra.mxu0 0.0
    %2461 = vmatprep.subr.mxu0 0.0
    %2462 = vmatpush2.msra.mxu0 0.0
    %2463 = vmatprep.subr.mxu0 0.0
    %2464 = vmatpush2.msra.mxu0 0.0
    %2465 = vmatprep.subr.mxu0 0.0
    %2466 = vmatpush2.msra.mxu0 0.0
    %2467 = vmatprep.subr.mxu0 0.0
    %2468 = vmatpush2.msra.mxu0 0.0
    %2469 = vmatprep.subr.mxu0 0.0
    %2470 = vmatpush2.msra.mxu0 0.0
    %2471 = vmatprep.subr.mxu0 0.0
    %2472 = vmatpush2.msra.mxu0 0.0
    %2473 = vmatprep.subr.mxu0 0.0
    %2474 = vmatpush2.msra.mxu0 0.0
    %2475 = vmatprep.subr.mxu0 0.0
    %2476 = vmatpush2.msra.mxu0 0.0
    %2477 = vmatprep.mubr.f32.mxu0 0.0
    %2478 = vmatmul.mubr.f32.gmra.mxu0 %v2269
    %v2479 = vpop.f32.mrf.mxu0
    %v2480 = vadd.f32 %v2265, %v2479
    %v2481 = vpop.f32.mrf.mxu0
    %v2482 = vadd.f32 %v2265, %v2481
    %2483 = vdwg.mxu0
    %2484 = vmatprep.subr.mxu0 0.0
    %2485 = vmatpush1.msra.mxu0 0.0
    %2486 = vmatprep.subr.mxu0 0.0
    %2487 = vmatpush1.msra.mxu0 0.0
    %2488 = vmatprep.subr.mxu0 0.0
    %2489 = vmatpush1.msra.mxu0 0.0
    %2490 = vmatprep.subr.mxu0 0.0
    %2491 = vmatpush1.msra.mxu0 0.0
    %2492 = vmatprep.subr.mxu0 0.0
    %2493 = vmatpush1.msra.mxu0 0.0
    %2494 = vmatprep.subr.mxu0 0.0
    %2495 = vmatpush1.msra.mxu0 0.0
    %2496 = vmatprep.subr.mxu0 0.0
    %2497 = vmatpush1.msra.mxu0 0.0
    %2498 = vmatprep.subr.mxu0 0.0
    %2499 = vmatpush1.msra.mxu0 0.0
    %2500 = vmatprep.subr.mxu0 0.0
    %2501 = vmatpush1.msra.mxu0 0.0
    %2502 = vmatprep.subr.mxu0 0.0
    %2503 = vmatpush1.msra.mxu0 0.0
    %2504 = vmatprep.subr.mxu0 0.0
    %2505 = vmatpush1.msra.mxu0 0.0
    %2506 = vmatprep.subr.mxu0 0.0
    %2507 = vmatpush1.msra.mxu0 0.0
    %2508 = vmatprep.subr.mxu0 %v2253
    %2509 = vmatpush1.msra.mxu0 %v2252
    %2510 = vmatprep.subr.mxu0 %v2237
    %2511 = vmatpush1.msra.mxu0 %v2236
    %2512 = vmatprep.subr.mxu0 %v2221
    %2513 = vmatpush1.msra.mxu0 %v2220
    %2514 = vmatprep.subr.mxu0 %v2205
    %2515 = vmatpush1.msra.mxu0 %v2204
    %2516 = vmatprep.subr.mxu0 0.0
    %2517 = vmatpush2.msra.mxu0 0.0
    %2518 = vmatprep.subr.mxu0 0.0
    %2519 = vmatpush2.msra.mxu0 0.0
    %2520 = vmatprep.subr.mxu0 0.0
    %2521 = vmatpush2.msra.mxu0 0.0
    %2522 = vmatprep.subr.mxu0 0.0
    %2523 = vmatpush2.msra.mxu0 0.0
    %2524 = vmatprep.subr.mxu0 0.0
    %2525 = vmatpush2.msra.mxu0 0.0
    %2526 = vmatprep.subr.mxu0 0.0
    %2527 = vmatpush2.msra.mxu0 0.0
    %2528 = vmatprep.subr.mxu0 0.0
    %2529 = vmatpush2.msra.mxu0 0.0
    %2530 = vmatprep.subr.mxu0 0.0
    %2531 = vmatpush2.msra.mxu0 0.0
    %2532 = vmatprep.subr.mxu0 0.0
    %2533 = vmatpush2.msra.mxu0 0.0
    %2534 = vmatprep.subr.mxu0 0.0
    %2535 = vmatpush2.msra.mxu0 0.0
    %2536 = vmatprep.subr.mxu0 0.0
    %2537 = vmatpush2.msra.mxu0 0.0
    %2538 = vmatprep.subr.mxu0 0.0
    %2539 = vmatpush2.msra.mxu0 0.0
    %2540 = vmatprep.subr.mxu0 0.0
    %2541 = vmatpush2.msra.mxu0 0.0
    %2542 = vmatprep.subr.mxu0 0.0
    %2543 = vmatpush2.msra.mxu0 0.0
    %2544 = vmatprep.subr.mxu0 0.0
    %2545 = vmatpush2.msra.mxu0 0.0
    %2546 = vmatprep.subr.mxu0 0.0
    %2547 = vmatpush2.msra.mxu0 0.0
    %2548 = vmatprep.mubr.f32.mxu0 0.0
    %2549 = vmatmul.mubr.f32.gmra.mxu0 %v2269
    %v2550 = vpop.f32.mrf.mxu0
    %v2551 = vadd.f32 %v2265, %v2550
    %v2552 = vpop.f32.mrf.mxu0
    %v2553 = vadd.f32 %v2265, %v2552
    %2554 = vdwg.mxu0
    %2555 = vmatprep.subr.mxu0 0.0
    %2556 = vmatpush1.msra.mxu0 0.0
    %2557 = vmatprep.subr.mxu0 0.0
    %2558 = vmatpush1.msra.mxu0 0.0
    %2559 = vmatprep.subr.mxu0 0.0
    %2560 = vmatpush1.msra.mxu0 0.0
    %2561 = vmatprep.subr.mxu0 0.0
    %2562 = vmatpush1.msra.mxu0 0.0
    %2563 = vmatprep.subr.mxu0 0.0
    %2564 = vmatpush1.msra.mxu0 0.0
    %2565 = vmatprep.subr.mxu0 0.0
    %2566 = vmatpush1.msra.mxu0 0.0
    %2567 = vmatprep.subr.mxu0 0.0
    %2568 = vmatpush1.msra.mxu0 0.0
    %2569 = vmatprep.subr.mxu0 0.0
    %2570 = vmatpush1.msra.mxu0 0.0
    %2571 = vmatprep.subr.mxu0 0.0
    %2572 = vmatpush1.msra.mxu0 0.0
    %2573 = vmatprep.subr.mxu0 0.0
    %2574 = vmatpush1.msra.mxu0 0.0
    %2575 = vmatprep.subr.mxu0 0.0
    %2576 = vmatpush1.msra.mxu0 0.0
    %2577 = vmatprep.subr.mxu0 0.0
    %2578 = vmatpush1.msra.mxu0 0.0
    %2579 = vmatprep.subr.mxu0 %v2255
    %2580 = vmatpush1.msra.mxu0 %v2254
    %2581 = vmatprep.subr.mxu0 %v2239
    %2582 = vmatpush1.msra.mxu0 %v2238
    %2583 = vmatprep.subr.mxu0 %v2223
    %2584 = vmatpush1.msra.mxu0 %v2222
    %2585 = vmatprep.subr.mxu0 %v2207
    %2586 = vmatpush1.msra.mxu0 %v2206
    %2587 = vmatprep.subr.mxu0 0.0
    %2588 = vmatpush2.msra.mxu0 0.0
    %2589 = vmatprep.subr.mxu0 0.0
    %2590 = vmatpush2.msra.mxu0 0.0
    %2591 = vmatprep.subr.mxu0 0.0
    %2592 = vmatpush2.msra.mxu0 0.0
    %2593 = vmatprep.subr.mxu0 0.0
    %2594 = vmatpush2.msra.mxu0 0.0
    %2595 = vmatprep.subr.mxu0 0.0
    %2596 = vmatpush2.msra.mxu0 0.0
    %2597 = vmatprep.subr.mxu0 0.0
    %2598 = vmatpush2.msra.mxu0 0.0
    %2599 = vmatprep.subr.mxu0 0.0
    %2600 = vmatpush2.msra.mxu0 0.0
    %2601 = vmatprep.subr.mxu0 0.0
    %2602 = vmatpush2.msra.mxu0 0.0
    %2603 = vmatprep.subr.mxu0 0.0
    %2604 = vmatpush2.msra.mxu0 0.0
    %2605 = vmatprep.subr.mxu0 0.0
    %2606 = vmatpush2.msra.mxu0 0.0
    %2607 = vmatprep.subr.mxu0 0.0
    %2608 = vmatpush2.msra.mxu0 0.0
    %2609 = vmatprep.subr.mxu0 0.0
    %2610 = vmatpush2.msra.mxu0 0.0
    %2611 = vmatprep.subr.mxu0 0.0
    %2612 = vmatpush2.msra.mxu0 0.0
    %2613 = vmatprep.subr.mxu0 0.0
    %2614 = vmatpush2.msra.mxu0 0.0
    %2615 = vmatprep.subr.mxu0 0.0
    %2616 = vmatpush2.msra.mxu0 0.0
    %2617 = vmatprep.subr.mxu0 0.0
    %2618 = vmatpush2.msra.mxu0 0.0
    %2619 = vmatprep.mubr.f32.mxu0 0.0
    %2620 = vmatmul.mubr.f32.gmra.mxu0 %v2269
    %v2621 = vpop.f32.mrf.mxu0
    %v2622 = vadd.f32 %v2265, %v2621
    %v2623 = vpop.f32.mrf.mxu0
    %v2624 = vadd.f32 %v2265, %v2623
    %2625 = vdwg.mxu0
    %2626 = vmatprep.subr.mxu0 0.0
    %2627 = vmatpush1.msra.mxu0 0.0
    %2628 = vmatprep.subr.mxu0 0.0
    %2629 = vmatpush1.msra.mxu0 0.0
    %2630 = vmatprep.subr.mxu0 0.0
    %2631 = vmatpush1.msra.mxu0 0.0
    %2632 = vmatprep.subr.mxu0 0.0
    %2633 = vmatpush1.msra.mxu0 0.0
    %2634 = vmatprep.subr.mxu0 0.0
    %2635 = vmatpush1.msra.mxu0 0.0
    %2636 = vmatprep.subr.mxu0 0.0
    %2637 = vmatpush1.msra.mxu0 0.0
    %2638 = vmatprep.subr.mxu0 0.0
    %2639 = vmatpush1.msra.mxu0 0.0
    %2640 = vmatprep.subr.mxu0 0.0
    %2641 = vmatpush1.msra.mxu0 0.0
    %2642 = vmatprep.subr.mxu0 0.0
    %2643 = vmatpush1.msra.mxu0 0.0
    %2644 = vmatprep.subr.mxu0 0.0
    %2645 = vmatpush1.msra.mxu0 0.0
    %2646 = vmatprep.subr.mxu0 0.0
    %2647 = vmatpush1.msra.mxu0 0.0
    %2648 = vmatprep.subr.mxu0 0.0
    %2649 = vmatpush1.msra.mxu0 0.0
    %2650 = vmatprep.subr.mxu0 %v2257
    %2651 = vmatpush1.msra.mxu0 %v2256
    %2652 = vmatprep.subr.mxu0 %v2241
    %2653 = vmatpush1.msra.mxu0 %v2240
    %2654 = vmatprep.subr.mxu0 %v2225
    %2655 = vmatpush1.msra.mxu0 %v2224
    %2656 = vmatprep.subr.mxu0 %v2209
    %2657 = vmatpush1.msra.mxu0 %v2208
    %2658 = vmatprep.subr.mxu0 0.0
    %2659 = vmatpush2.msra.mxu0 0.0
    %2660 = vmatprep.subr.mxu0 0.0
    %2661 = vmatpush2.msra.mxu0 0.0
    %2662 = vmatprep.subr.mxu0 0.0
    %2663 = vmatpush2.msra.mxu0 0.0
    %2664 = vmatprep.subr.mxu0 0.0
    %2665 = vmatpush2.msra.mxu0 0.0
    %2666 = vmatprep.subr.mxu0 0.0
    %2667 = vmatpush2.msra.mxu0 0.0
    %2668 = vmatprep.subr.mxu0 0.0
    %2669 = vmatpush2.msra.mxu0 0.0
    %2670 = vmatprep.subr.mxu0 0.0
    %2671 = vmatpush2.msra.mxu0 0.0
    %2672 = vmatprep.subr.mxu0 0.0
    %2673 = vmatpush2.msra.mxu0 0.0
    %2674 = vmatprep.subr.mxu0 0.0
    %2675 = vmatpush2.msra.mxu0 0.0
    %2676 = vmatprep.subr.mxu0 0.0
    %2677 = vmatpush2.msra.mxu0 0.0
    %2678 = vmatprep.subr.mxu0 0.0
    %2679 = vmatpush2.msra.mxu0 0.0
    %2680 = vmatprep.subr.mxu0 0.0
    %2681 = vmatpush2.msra.mxu0 0.0
    %2682 = vmatprep.subr.mxu0 0.0
    %2683 = vmatpush2.msra.mxu0 0.0
    %2684 = vmatprep.subr.mxu0 0.0
    %2685 = vmatpush2.msra.mxu0 0.0
    %2686 = vmatprep.subr.mxu0 0.0
    %2687 = vmatpush2.msra.mxu0 0.0
    %2688 = vmatprep.subr.mxu0 0.0
    %2689 = vmatpush2.msra.mxu0 0.0
    %2690 = vmatprep.mubr.f32.mxu0 0.0
    %2691 = vmatmul.mubr.f32.gmra.mxu0 %v2269
    %v2692 = vpop.f32.mrf.mxu0
    %v2693 = vadd.f32 %v2265, %v2692
    %v2694 = vpop.f32.mrf.mxu0
    %v2695 = vadd.f32 %v2265, %v2694
    %2696 = vdwg.mxu0
    %2697 = vmatprep.subr.mxu0 0.0
    %2698 = vmatpush1.msra.mxu0 0.0
    %2699 = vmatprep.subr.mxu0 0.0
    %2700 = vmatpush1.msra.mxu0 0.0
    %2701 = vmatprep.subr.mxu0 0.0
    %2702 = vmatpush1.msra.mxu0 0.0
    %2703 = vmatprep.subr.mxu0 0.0
    %2704 = vmatpush1.msra.mxu0 0.0
    %2705 = vmatprep.subr.mxu0 0.0
    %2706 = vmatpush1.msra.mxu0 0.0
    %2707 = vmatprep.subr.mxu0 0.0
    %2708 = vmatpush1.msra.mxu0 0.0
    %2709 = vmatprep.subr.mxu0 0.0
    %2710 = vmatpush1.msra.mxu0 0.0
    %2711 = vmatprep.subr.mxu0 0.0
    %2712 = vmatpush1.msra.mxu0 0.0
    %2713 = vmatprep.subr.mxu0 0.0
    %2714 = vmatpush1.msra.mxu0 0.0
    %2715 = vmatprep.subr.mxu0 0.0
    %2716 = vmatpush1.msra.mxu0 0.0
    %2717 = vmatprep.subr.mxu0 0.0
    %2718 = vmatpush1.msra.mxu0 0.0
    %2719 = vmatprep.subr.mxu0 0.0
    %2720 = vmatpush1.msra.mxu0 0.0
    %2721 = vmatprep.subr.mxu0 %v2259
    %2722 = vmatpush1.msra.mxu0 %v2258
    %2723 = vmatprep.subr.mxu0 %v2243
    %2724 = vmatpush1.msra.mxu0 %v2242
    %2725 = vmatprep.subr.mxu0 %v2227
    %2726 = vmatpush1.msra.mxu0 %v2226
    %2727 = vmatprep.subr.mxu0 %v2211
    %2728 = vmatpush1.msra.mxu0 %v2210
    %2729 = vmatprep.subr.mxu0 0.0
    %2730 = vmatpush2.msra.mxu0 0.0
    %2731 = vmatprep.subr.mxu0 0.0
    %2732 = vmatpush2.msra.mxu0 0.0
    %2733 = vmatprep.subr.mxu0 0.0
    %2734 = vmatpush2.msra.mxu0 0.0
    %2735 = vmatprep.subr.mxu0 0.0
    %2736 = vmatpush2.msra.mxu0 0.0
    %2737 = vmatprep.subr.mxu0 0.0
    %2738 = vmatpush2.msra.mxu0 0.0
    %2739 = vmatprep.subr.mxu0 0.0
    %2740 = vmatpush2.msra.mxu0 0.0
    %2741 = vmatprep.subr.mxu0 0.0
    %2742 = vmatpush2.msra.mxu0 0.0
    %2743 = vmatprep.subr.mxu0 0.0
    %2744 = vmatpush2.msra.mxu0 0.0
    %2745 = vmatprep.subr.mxu0 0.0
    %2746 = vmatpush2.msra.mxu0 0.0
    %2747 = vmatprep.subr.mxu0 0.0
    %2748 = vmatpush2.msra.mxu0 0.0
    %2749 = vmatprep.subr.mxu0 0.0
    %2750 = vmatpush2.msra.mxu0 0.0
    %2751 = vmatprep.subr.mxu0 0.0
    %2752 = vmatpush2.msra.mxu0 0.0
    %2753 = vmatprep.subr.mxu0 0.0
    %2754 = vmatpush2.msra.mxu0 0.0
    %2755 = vmatprep.subr.mxu0 0.0
    %2756 = vmatpush2.msra.mxu0 0.0
    %2757 = vmatprep.subr.mxu0 0.0
    %2758 = vmatpush2.msra.mxu0 0.0
    %2759 = vmatprep.subr.mxu0 0.0
    %2760 = vmatpush2.msra.mxu0 0.0
    %2761 = vmatprep.mubr.f32.mxu0 0.0
    %2762 = vmatmul.mubr.f32.gmra.mxu0 %v2269
    %v2763 = vpop.f32.mrf.mxu0
    %v2764 = vadd.f32 %v2265, %v2763
    %v2765 = vpop.f32.mrf.mxu0
    %v2766 = vadd.f32 %v2265, %v2765
    %2767 = vdwg.mxu0
    %2768 = vmatprep.subr.mxu0 0.0
    %2769 = vmatpush1.msra.mxu0 0.0
    %2770 = vmatprep.subr.mxu0 0.0
    %2771 = vmatpush1.msra.mxu0 0.0
    %2772 = vmatprep.subr.mxu0 0.0
    %2773 = vmatpush1.msra.mxu0 0.0
    %2774 = vmatprep.subr.mxu0 0.0
    %2775 = vmatpush1.msra.mxu0 0.0
    %2776 = vmatprep.subr.mxu0 0.0
    %2777 = vmatpush1.msra.mxu0 0.0
    %2778 = vmatprep.subr.mxu0 0.0
    %2779 = vmatpush1.msra.mxu0 0.0
    %2780 = vmatprep.subr.mxu0 0.0
    %2781 = vmatpush1.msra.mxu0 0.0
    %2782 = vmatprep.subr.mxu0 0.0
    %2783 = vmatpush1.msra.mxu0 0.0
    %2784 = vmatprep.subr.mxu0 0.0
    %2785 = vmatpush1.msra.mxu0 0.0
    %2786 = vmatprep.subr.mxu0 0.0
    %2787 = vmatpush1.msra.mxu0 0.0
    %2788 = vmatprep.subr.mxu0 0.0
    %2789 = vmatpush1.msra.mxu0 0.0
    %2790 = vmatprep.subr.mxu0 0.0
    %2791 = vmatpush1.msra.mxu0 0.0
    %2792 = vmatprep.subr.mxu0 %v2261
    %2793 = vmatpush1.msra.mxu0 %v2260
    %2794 = vmatprep.subr.mxu0 %v2245
    %2795 = vmatpush1.msra.mxu0 %v2244
    %2796 = vmatprep.subr.mxu0 %v2229
    %2797 = vmatpush1.msra.mxu0 %v2228
    %2798 = vmatprep.subr.mxu0 %v2213
    %2799 = vmatpush1.msra.mxu0 %v2212
    %2800 = vmatprep.subr.mxu0 0.0
    %2801 = vmatpush2.msra.mxu0 0.0
    %2802 = vmatprep.subr.mxu0 0.0
    %2803 = vmatpush2.msra.mxu0 0.0
    %2804 = vmatprep.subr.mxu0 0.0
    %2805 = vmatpush2.msra.mxu0 0.0
    %2806 = vmatprep.subr.mxu0 0.0
    %2807 = vmatpush2.msra.mxu0 0.0
    %2808 = vmatprep.subr.mxu0 0.0
    %2809 = vmatpush2.msra.mxu0 0.0
    %2810 = vmatprep.subr.mxu0 0.0
    %2811 = vmatpush2.msra.mxu0 0.0
    %2812 = vmatprep.subr.mxu0 0.0
    %2813 = vmatpush2.msra.mxu0 0.0
    %2814 = vmatprep.subr.mxu0 0.0
    %2815 = vmatpush2.msra.mxu0 0.0
    %2816 = vmatprep.subr.mxu0 0.0
    %2817 = vmatpush2.msra.mxu0 0.0
    %2818 = vmatprep.subr.mxu0 0.0
    %2819 = vmatpush2.msra.mxu0 0.0
    %2820 = vmatprep.subr.mxu0 0.0
    %2821 = vmatpush2.msra.mxu0 0.0
    %2822 = vmatprep.subr.mxu0 0.0
    %2823 = vmatpush2.msra.mxu0 0.0
    %2824 = vmatprep.subr.mxu0 0.0
    %2825 = vmatpush2.msra.mxu0 0.0
    %2826 = vmatprep.subr.mxu0 0.0
    %2827 = vmatpush2.msra.mxu0 0.0
    %2828 = vmatprep.subr.mxu0 0.0
    %2829 = vmatpush2.msra.mxu0 0.0
    %2830 = vmatprep.subr.mxu0 0.0
    %2831 = vmatpush2.msra.mxu0 0.0
    %2832 = vmatprep.mubr.f32.mxu0 0.0
    %2833 = vmatmul.mubr.f32.gmra.mxu0 %v2269
    %v2834 = vpop.f32.mrf.mxu0
    %v2835 = vadd.f32 %v2265, %v2834
    %v2836 = vpop.f32.mrf.mxu0
    %v2837 = vadd.f32 %v2265, %v2836
    %2838 = vdwg.mxu0
    %v2839 = vmax.f32 %v2338, 0.0
    %v2840 = vmax.f32 %v2340, 0.0
    %v2841 = vmax.f32 %v2409, 0.0
    %v2842 = vmax.f32 %v2411, 0.0
    %v2843 = vmax.f32 %v2480, 0.0
    %v2844 = vmax.f32 %v2482, 0.0
    %v2845 = vmax.f32 %v2551, 0.0
    %v2846 = vmax.f32 %v2553, 0.0
    %v2847 = vmax.f32 %v2622, 0.0
    %v2848 = vmax.f32 %v2624, 0.0
    %v2849 = vmax.f32 %v2693, 0.0
    %v2850 = vmax.f32 %v2695, 0.0
    %v2851 = vmax.f32 %v2764, 0.0
    %v2852 = vmax.f32 %v2766, 0.0
    %v2853 = vmax.f32 %v2835, 0.0
    %v2854 = vmax.f32 %v2837, 0.0
    %v2855 = vadd.f32 %v2839, %v2840
    %v2856 = vadd.f32 %v2855, %v2841
    %v2857 = vadd.f32 %v2856, %v2842
    %v2858 = vadd.f32 %v2857, %v2843
    %v2859 = vadd.f32 %v2858, %v2844
    %v2860 = vadd.f32 %v2859, %v2845
    %v2861 = vadd.f32 %v2860, %v2846
    %v2862 = vadd.f32 %v2861, %v2847
    %v2863 = vadd.f32 %v2862, %v2848
    %v2864 = vadd.f32 %v2863, %v2849
    %v2865 = vadd.f32 %v2864, %v2850
    %v2866 = vadd.f32 %v2865, %v2851
    %v2867 = vadd.f32 %v2866, %v2852
    %v2868 = vadd.f32 %v2867, %v2853
    %v2869 = vadd.f32 %v2868, %v2854
    %v2871 = vlaneseq
    %v2872 = vshrl.u32 %v2871, 7
    %v2873 = vsub.s32 0, %v2872
    %v2874 = vrot.slane %v57, %v2873
    %2875 = vrot.lane.b32.xlu0 %v2874, 124
    %v2876 = vpop.permute.xlu0 %2875
    %vm2877 = vcmask 64512
    %v2878 = vsel %vm2877, %v2876, 0
    %2880 = vmatprep.subr.mxu0 0.0
    %2881 = vmatpush1.msra.mxu0 0.0
    %2882 = vmatprep.subr.mxu0 0.0
    %2883 = vmatpush1.msra.mxu0 0.0
    %2884 = vmatprep.subr.mxu0 0.0
    %2885 = vmatpush1.msra.mxu0 0.0
    %2886 = vmatprep.subr.mxu0 0.0
    %2887 = vmatpush1.msra.mxu0 0.0
    %2888 = vmatprep.subr.mxu0 0.0
    %2889 = vmatpush1.msra.mxu0 0.0
    %2890 = vmatprep.subr.mxu0 0.0
    %2891 = vmatpush1.msra.mxu0 0.0
    %2892 = vmatprep.subr.mxu0 0.0
    %2893 = vmatpush1.msra.mxu0 0.0
    %2894 = vmatprep.subr.mxu0 0.0
    %2895 = vmatpush1.msra.mxu0 0.0
    %2896 = vmatprep.subr.mxu0 0.0
    %2897 = vmatpush1.msra.mxu0 0.0
    %2898 = vmatprep.subr.mxu0 0.0
    %2899 = vmatpush1.msra.mxu0 0.0
    %2900 = vmatprep.subr.mxu0 0.0
    %2901 = vmatpush1.msra.mxu0 0.0
    %2902 = vmatprep.subr.mxu0 0.0
    %2903 = vmatpush1.msra.mxu0 0.0
    %2904 = vmatprep.subr.mxu0 0.0
    %2905 = vmatpush1.msra.mxu0 0.0
    %2906 = vmatprep.subr.mxu0 0.0
    %2907 = vmatpush1.msra.mxu0 0.0
    %2908 = vmatprep.subr.mxu0 0.0
    %2909 = vmatpush1.msra.mxu0 0.0
    %2910 = vmatprep.subr.mxu0 0.0
    %2911 = vmatpush1.msra.mxu0 %v2869
    %2912 = vmatprep.subr.mxu0 0.0
    %2913 = vmatpush2.msra.mxu0 0.0
    %2914 = vmatprep.subr.mxu0 0.0
    %2915 = vmatpush2.msra.mxu0 0.0
    %2916 = vmatprep.subr.mxu0 0.0
    %2917 = vmatpush2.msra.mxu0 0.0
    %2918 = vmatprep.subr.mxu0 0.0
    %2919 = vmatpush2.msra.mxu0 0.0
    %2920 = vmatprep.subr.mxu0 0.0
    %2921 = vmatpush2.msra.mxu0 0.0
    %2922 = vmatprep.subr.mxu0 0.0
    %2923 = vmatpush2.msra.mxu0 0.0
    %2924 = vmatprep.subr.mxu0 0.0
    %2925 = vmatpush2.msra.mxu0 0.0
    %2926 = vmatprep.subr.mxu0 0.0
    %2927 = vmatpush2.msra.mxu0 0.0
    %2928 = vmatprep.subr.mxu0 0.0
    %2929 = vmatpush2.msra.mxu0 0.0
    %2930 = vmatprep.subr.mxu0 0.0
    %2931 = vmatpush2.msra.mxu0 0.0
    %2932 = vmatprep.subr.mxu0 0.0
    %2933 = vmatpush2.msra.mxu0 0.0
    %2934 = vmatprep.subr.mxu0 0.0
    %2935 = vmatpush2.msra.mxu0 0.0
    %2936 = vmatprep.subr.mxu0 0.0
    %2937 = vmatpush2.msra.mxu0 0.0
    %2938 = vmatprep.subr.mxu0 0.0
    %2939 = vmatpush2.msra.mxu0 0.0
    %2940 = vmatprep.subr.mxu0 0.0
    %2941 = vmatpush2.msra.mxu0 0.0
    %2942 = vmatprep.subr.mxu0 0.0
    %2943 = vmatpush2.msra.mxu0 0.0
    %2944 = vmatprep.mubr.f32.mxu0 0.0
    %2945 = vmatmul.mubr.f32.gmra.mxu0 %v2878
    %v2946 = vpop.f32.mrf.mxu0
    %v2947 = vadd.f32 0.0, %v2946
    %v2948 = vpop.f32.mrf.mxu0
    %2949 = vdwg.mxu0
    %vm2950 = vcmask 31744
    %v2951 = vsel %vm2950, %v57, 0
    %vm2953 = vcmask 1043456
    %v2955 = vsel %vm2953, %v1723, 0
    %2957 = vmatprep.subr.mxu0 0.0
    %2958 = vmatpush1.msra.mxu0 0.0
    %2959 = vmatprep.subr.mxu0 0.0
    %2960 = vmatpush1.msra.mxu0 0.0
    %2961 = vmatprep.subr.mxu0 0.0
    %2962 = vmatpush1.msra.mxu0 0.0
    %2963 = vmatprep.subr.mxu0 0.0
    %2964 = vmatpush1.msra.mxu0 0.0
    %2965 = vmatprep.subr.mxu0 0.0
    %2966 = vmatpush1.msra.mxu0 0.0
    %2967 = vmatprep.subr.mxu0 0.0
    %2968 = vmatpush1.msra.mxu0 0.0
    %2969 = vmatprep.subr.mxu0 0.0
    %2970 = vmatpush1.msra.mxu0 0.0
    %2971 = vmatprep.subr.mxu0 0.0
    %2972 = vmatpush1.msra.mxu0 0.0
    %2973 = vmatprep.subr.mxu0 0.0
    %2974 = vmatpush1.msra.mxu0 0.0
    %2975 = vmatprep.subr.mxu0 0.0
    %2976 = vmatpush1.msra.mxu0 0.0
    %2977 = vmatprep.subr.mxu0 0.0
    %2978 = vmatpush1.msra.mxu0 0.0
    %2979 = vmatprep.subr.mxu0 0.0
    %2980 = vmatpush1.msra.mxu0 0.0
    %2981 = vmatprep.subr.mxu0 0.0
    %2982 = vmatpush1.msra.mxu0 0.0
    %2983 = vmatprep.subr.mxu0 0.0
    %2984 = vmatpush1.msra.mxu0 0.0
    %2985 = vmatprep.subr.mxu0 0.0
    %2986 = vmatpush1.msra.mxu0 0.0
    %2987 = vmatprep.subr.mxu0 0.0
    %2988 = vmatpush1.msra.mxu0 %v2955
    %2989 = vmatprep.subr.mxu0 0.0
    %2990 = vmatpush2.msra.mxu0 0.0
    %2991 = vmatprep.subr.mxu0 0.0
    %2992 = vmatpush2.msra.mxu0 0.0
    %2993 = vmatprep.subr.mxu0 0.0
    %2994 = vmatpush2.msra.mxu0 0.0
    %2995 = vmatprep.subr.mxu0 0.0
    %2996 = vmatpush2.msra.mxu0 0.0
    %2997 = vmatprep.subr.mxu0 0.0
    %2998 = vmatpush2.msra.mxu0 0.0
    %2999 = vmatprep.subr.mxu0 0.0
    %3000 = vmatpush2.msra.mxu0 0.0
    %3001 = vmatprep.subr.mxu0 0.0
    %3002 = vmatpush2.msra.mxu0 0.0
    %3003 = vmatprep.subr.mxu0 0.0
    %3004 = vmatpush2.msra.mxu0 0.0
    %3005 = vmatprep.subr.mxu0 0.0
    %3006 = vmatpush2.msra.mxu0 0.0
    %3007 = vmatprep.subr.mxu0 0.0
    %3008 = vmatpush2.msra.mxu0 0.0
    %3009 = vmatprep.subr.mxu0 0.0
    %3010 = vmatpush2.msra.mxu0 0.0
    %3011 = vmatprep.subr.mxu0 0.0
    %3012 = vmatpush2.msra.mxu0 0.0
    %3013 = vmatprep.subr.mxu0 0.0
    %3014 = vmatpush2.msra.mxu0 0.0
    %3015 = vmatprep.subr.mxu0 0.0
    %3016 = vmatpush2.msra.mxu0 0.0
    %3017 = vmatprep.subr.mxu0 0.0
    %3018 = vmatpush2.msra.mxu0 0.0
    %3019 = vmatprep.subr.mxu0 0.0
    %3020 = vmatpush2.msra.mxu0 0.0
    %3021 = vmatprep.mubr.f32.mxu0 0.0
    %3022 = vmatmul.mubr.f32.gmra.mxu0 %v2951
    %v3023 = vpop.f32.mrf.mxu0
    %v3024 = vadd.f32 %v2947, %v3023
    %v3025 = vpop.f32.mrf.mxu0
    %3026 = vdwg.mxu0
    %v3027 = vld [vmem:[#allocation2] sm:$0x1]
    %3029 = vset.pattern.permute.xlu0 0
    %3030 = vperm.xlu0 %3029, %v3027
    %v3031 = vpop.permute.xlu0 %3030
    %v3033 = vlaneseq
    %v3034 = vshrl.u32 %v3033, 7
    %v3035 = vsub.s32 0, %v3034
    %v3036 = vrot.slane %v3031, %v3035
    %v3037 = vadd.f32 %v3024, %v3036
    %3038 = vst [vmem:[#allocation6] sm:$0x1] %v3037
    // Predicated region
    $region34: #{tpu_custom_call.1} parent=1 // pred_check
      _
    $region35: #{tpu_custom_call.1} parent=1 // pred_check_branch
      %3040 = sbr.rel (0) target = $region37
    $region36: #{tpu_custom_call.1} parent=1 // pred_region
      %s3042 = ssub.s32 16, 16
      %3043 = vsyncadd [#allocation5], %s3042
      %s3045 = sshll.u32 [#allocation6], 4
      %s3046 = int_to_ptr.vmem [resolvable:$true] %s3045
      %3048 = dma.vmem_to_hbm [thread:$0]  %s3046, 16, %s7, [#allocation5]
    $region37: #{tpu_custom_call.1} parent=1 // pred_fallthru
      _
    // Predicated region
    $region38: #{tpu_custom_call.1} parent=1 // pred_check
      _
    $region39: #{tpu_custom_call.1} parent=1 // pred_check_branch
      %3050 = sbr.rel (0) target = $region41
    $region40: #{tpu_custom_call.1} parent=1 // pred_region
      %3051 = dma.done [#allocation5], 16
    $region41: #{tpu_custom_call.1} parent=1 // pred_fallthru
      _
    %3052 = vsyncpa [#allocation4], 1
    %3053 = vsyncpa [#allocation5], 1

</llo_original>
